<compile_context>
chip_gen: v7x
topology: tpu7x:2x2x1
jax: 0.10.0
libtpu: 0.0.40
codegen_flags: <defaults>
</compile_context>

<pallas_src>
import functools

import jax
import jax.numpy as jnp
from jax.experimental import pallas as pl
from jax.experimental.pallas import tpu as pltpu


# --------------------------- Pallas kernel ---------------------------------

def lstm_reg_kernel(x_ref, wih0_ref, b0_ref, wbd_ref, wih1_ref, b1_ref,
                    wreg_ref, breg_ref,
                    y_ref,
                    xg_ref, h1s_ref,
                    *, seq_len, tile_b):
    S, B = seq_len, tile_b
    H = wih1_ref.shape[0]                      # wih1 is (H, 4H)

    # (1) Hoisted layer-0 input projection for ALL timesteps of this batch
    #     tile: one (S*B, I) @ (I, 4H) matmul instead of S tiny ones.
    xg_ref[...] = (
        jnp.dot(x_ref[...], wih0_ref[...], preferred_element_type=jnp.float32)
        + b0_ref[...])

    # Weights are small at this size; load once, reused across the unrolled loop.
    w_bd = wbd_ref[...]                        # blockdiag(whh0, whh1): (2H, 8H)
    wih1 = wih1_ref[...]
    b1 = b1_ref[...]

    def gates_to_hc(gates, c_prev):
        # Gate columns were permuted in the wrapper to [i, f, o, g]:
        # one sigmoid over 3H lanes + one tanh over H lanes per cell.
        sig = jax.nn.sigmoid(gates[:, :3 * H])
        g = jnp.tanh(gates[:, 3 * H:])
        i_g = sig[:, 0 * H:1 * H]
        f_g = sig[:, 1 * H:2 * H]
        o_g = sig[:, 2 * H:3 * H]
        c_new = f_g * c_prev + i_g * g
        return o_g * jnp.tanh(c_new), c_new

    # (2) Whole recurrence in one invocation; zero initial state as in PyTorch.
    #     hh = [h0 | h1] feeds the single block-diagonal recurrent matmul.
    hh = jnp.zeros((B, 2 * H), jnp.float32)
    c0 = jnp.zeros((B, H), jnp.float32)
    c1 = jnp.zeros((B, H), jnp.float32)
    for t in range(S):
        lo, hi = t * B, (t + 1) * B            # static, sublane-tile aligned
        # One fused recurrent matmul: depends only on previous-step state.
        g_rec = jnp.dot(hh, w_bd, preferred_element_type=jnp.float32)
        # layer 0
        g0 = xg_ref[lo:hi, :] + g_rec[:, :4 * H]
        h0, c0 = gates_to_hc(g0, c0)
        # layer 1 (needs this step's h0 -> separate wih1 matmul)
        g1 = (jnp.dot(h0, wih1, preferred_element_type=jnp.float32)
              + g_rec[:, 4 * H:] + b1)
        h1, c1 = gates_to_hc(g1, c1)
        h1s_ref[lo:hi, :] = h1
        hh = jnp.concatenate([h0, h1], axis=1)

    # (3) Lane-dense (128-wide, zero-padded) Linear head over all rows at once.
    y_ref[...] = (
        jnp.dot(h1s_ref[...], wreg_ref[...], preferred_element_type=jnp.float32)
        + breg_ref[...]).astype(y_ref.dtype)


# --------------------------- wrapper ----------------------------------------

def lstm_reg_forward(x, params):
    S, B, I = x.shape
    H = params["whh0"].shape[0]
    O = params["wreg"].shape[1]

    TB = 8                                     # batch sublane tile
    B_pad = max(TB, ((B + TB - 1) // TB) * TB)
    n_bt = B_pad // TB
    if B_pad != B:
        x = jnp.pad(x, ((0, 0), (0, B_pad - B), (0, 0)))

    # Batch-tile-major row layout so each grid step gets a contiguous
    # (S*TB, I) block: (S, B_pad, I) -> (n_bt, S, TB, I) -> 2D.
    x_bm = (x.reshape(S, n_bt, TB, I)
             .transpose(1, 0, 2, 3)
             .reshape(n_bt * S * TB, I))

    # Gate-column permutation: PyTorch [i, f, g, o] -> kernel [i, f, o, g].
    perm = jnp.concatenate([jnp.arange(0, 2 * H),
                            jnp.arange(3 * H, 4 * H),
                            jnp.arange(2 * H, 3 * H)])
    wih0 = params["wih0"][:, perm]
    whh0 = params["whh0"][:, perm]
    b0 = params["b0"][:, perm]
    wih1 = params["wih1"][:, perm]
    whh1 = params["whh1"][:, perm]
    b1 = params["b1"][:, perm]

    # Block-diagonal recurrent weight: (2H, 8H).
    w_bd = jnp.zeros((2 * H, 8 * H), jnp.float32)
    w_bd = w_bd.at[:H, :4 * H].set(whh0)
    w_bd = w_bd.at[H:, 4 * H:].set(whh1)

    # Lane-dense head: pad output dim to 128 lanes (sliced back below).
    O_pad = 128
    wreg = jnp.zeros((H, O_pad), jnp.float32).at[:, :O].set(params["wreg"])
    breg = jnp.zeros((1, O_pad), jnp.float32).at[:, :O].set(params["breg"])

    TBR = S * TB                               # rows per batch-tile block

    y_bm = pl.pallas_call(
        functools.partial(lstm_reg_kernel, seq_len=S, tile_b=TB),
        out_shape=jax.ShapeDtypeStruct((n_bt * TBR, O_pad), jnp.float32),
        grid=(n_bt,),
        in_specs=[
            pl.BlockSpec((TBR, I), lambda bt: (bt, 0)),          # x (per tile)
            pl.BlockSpec((I, 4 * H), lambda bt: (0, 0)),         # wih0
            pl.BlockSpec((1, 4 * H), lambda bt: (0, 0)),         # b0
            pl.BlockSpec((2 * H, 8 * H), lambda bt: (0, 0)),     # w_bd
            pl.BlockSpec((H, 4 * H), lambda bt: (0, 0)),         # wih1
            pl.BlockSpec((1, 4 * H), lambda bt: (0, 0)),         # b1
            pl.BlockSpec((H, O_pad), lambda bt: (0, 0)),         # wreg (padded)
            pl.BlockSpec((1, O_pad), lambda bt: (0, 0)),         # breg (padded)
        ],
        out_specs=pl.BlockSpec((TBR, O_pad), lambda bt: (bt, 0)),
        scratch_shapes=[
            pltpu.VMEM((TBR, 4 * H), jnp.float32),  # hoisted X@W_ih0 + b0
            pltpu.VMEM((TBR, H), jnp.float32),      # h1 history for the head
        ],
        compiler_params=pltpu.CompilerParams(
            dimension_semantics=("parallel",)),     # megacore sharding on v7x
    )(x_bm, wih0, b0, w_bd, wih1, b1, wreg, breg)

    y = (y_bm.reshape(n_bt, S, TB, O_pad)
             .transpose(1, 0, 2, 3)
             .reshape(S, B_pad, O_pad))
    return y[:, :B, :O]


# --------------------------- pure-JAX reference ------------------------------

def lstm_reg_reference(x, params):
    H = params["whh0"].shape[0]

    def cell(inp, h, c, w_ih, w_hh, b):
        gates = inp @ w_ih + h @ w_hh + b          # PyTorch order i, f, g, o
        i = jax.nn.sigmoid(gates[:, 0 * H:1 * H])
        f = jax.nn.sigmoid(gates[:, 1 * H:2 * H])
        g = jnp.tanh(gates[:, 2 * H:3 * H])
        o = jax.nn.sigmoid(gates[:, 3 * H:4 * H])
        c = f * c + i * g
        h = o * jnp.tanh(c)
        return h, c

    S, B, I = x.shape
    z = jnp.zeros((B, H), jnp.float32)

    def step(carry, x_t):
        h0, c0, h1, c1 = carry
        h0, c0 = cell(x_t, h0, c0, params["wih0"], params["whh0"], params["b0"])
        h1, c1 = cell(h0, h1, c1, params["wih1"], params["whh1"], params["b1"])
        y = h1 @ params["wreg"] + params["breg"]
        return (h0, c0, h1, c1), y

    _, ys = jax.lax.scan(step, (z, z, z, z), x)
    return ys


# --------------------------- parameter init ----------------------------------

def init_params(key, input_size, hidden_size, output_size):
    # PyTorch-style uniform(-1/sqrt(H), 1/sqrt(H)); weights stored transposed
    # (in_features, out_features) so kernels do `x @ W`.  Gate order here is
    # the PyTorch [i, f, g, o]; the wrapper permutes to [i, f, o, g].
    k = 1.0 / jnp.sqrt(hidden_size)
    keys = jax.random.split(key, 10)

    def u(kk, shape):
        return jax.random.uniform(kk, shape, jnp.float32, -k, k)

    H, I, O = hidden_size, input_size, output_size
    return {
        "wih0": u(keys[0], (I, 4 * H)),
        "whh0": u(keys[1], (H, 4 * H)),
        "b0":   u(keys[2], (1, 4 * H)) + u(keys[3], (1, 4 * H)),  # b_ih + b_hh
        "wih1": u(keys[4], (H, 4 * H)),
        "whh1": u(keys[5], (H, 4 * H)),
        "b1":   u(keys[6], (1, 4 * H)) + u(keys[7], (1, 4 * H)),
        "wreg": u(keys[8], (H, O)),
        "breg": u(keys[9], (1, O)),            # nn.Linear bias: uniform too
    }


# --------------------------- main --------------------------------------------

if __name__ == "__main__":
    SEQ, BATCH, INPUT, HIDDEN, OUTPUT = 8, 2, 16, 32, 1

    root = jax.random.PRNGKey(0)
    kx, kp = jax.random.split(root)
    x = jax.random.normal(kx, (SEQ, BATCH, INPUT), jnp.float32)
    params = init_params(kp, INPUT, HIDDEN, OUTPUT)

    y = jax.block_until_ready(lstm_reg_forward(x, params))
    assert y.shape == (SEQ, BATCH, OUTPUT), y.shape

    y_ref = jax.block_until_ready(lstm_reg_reference(x, params))
    assert jnp.allclose(y, y_ref, atol=1e-3, rtol=1e-3), "mismatch vs JAX reference"

    print("KERNEL_OK")
</pallas_src>

<mosaic_0001>
module attributes {stable_mosaic.version = 11 : i64} {
  func.func @lstm_reg_kernel(%arg0: i32, %arg1: memref<64x16xf32, #tpu.memory_space<vmem>>, %arg2: memref<16x128xf32, #tpu.memory_space<vmem>>, %arg3: memref<1x128xf32, #tpu.memory_space<vmem>>, %arg4: memref<64x256xf32, #tpu.memory_space<vmem>>, %arg5: memref<32x128xf32, #tpu.memory_space<vmem>>, %arg6: memref<1x128xf32, #tpu.memory_space<vmem>>, %arg7: memref<32x128xf32, #tpu.memory_space<vmem>>, %arg8: memref<1x128xf32, #tpu.memory_space<vmem>>, %arg9: memref<64x128xf32, #tpu.memory_space<vmem>>, %arg10: memref<64x128xf32, #tpu.memory_space<vmem>>, %arg11: memref<64x32xf32, #tpu.memory_space<vmem>>) attributes {dimension_semantics = [#tpu.dimension_semantics<parallel>], iteration_bounds = array<i64: 1>, scalar_prefetch = 0 : i64, scratch_operands = 2 : i64, tpu.core_type = #tpu.core_type<tc>, window_params = [{transform_indices = @transform_0, window_bounds = array<i64: 64, 16>}, {pipeline_mode = #tpu.pipeline_mode<synchronous>, transform_indices = @transform_1, window_bounds = array<i64: 16, 128>}, {pipeline_mode = #tpu.pipeline_mode<synchronous>, transform_indices = @transform_2, window_bounds = array<i64: 1, 128>}, {pipeline_mode = #tpu.pipeline_mode<synchronous>, transform_indices = @transform_3, window_bounds = array<i64: 64, 256>}, {pipeline_mode = #tpu.pipeline_mode<synchronous>, transform_indices = @transform_4, window_bounds = array<i64: 32, 128>}, {pipeline_mode = #tpu.pipeline_mode<synchronous>, transform_indices = @transform_5, window_bounds = array<i64: 1, 128>}, {pipeline_mode = #tpu.pipeline_mode<synchronous>, transform_indices = @transform_6, window_bounds = array<i64: 32, 128>}, {pipeline_mode = #tpu.pipeline_mode<synchronous>, transform_indices = @transform_7, window_bounds = array<i64: 1, 128>}, {transform_indices = @transform_8, window_bounds = array<i64: 64, 128>}]} {
    %c0 = arith.constant 0 : index
    %c0_0 = arith.constant 0 : index
    %0 = vector.load %arg1[%c0, %c0_0] : memref<64x16xf32, #tpu.memory_space<vmem>>, vector<64x16xf32>
    %c0_1 = arith.constant 0 : index
    %c0_2 = arith.constant 0 : index
    %1 = vector.load %arg2[%c0_1, %c0_2] : memref<16x128xf32, #tpu.memory_space<vmem>>, vector<16x128xf32>
    %cst = arith.constant dense<0.000000e+00> : vector<64x128xf32>
    %2 = tpu.matmul %0, %1, %cst {dimension_numbers = #tpu.dot_dimension_numbers<[1], [0], [0], [1], [0, 0, 1, 1], [], []>} : vector<64x16xf32>, vector<16x128xf32>, vector<64x128xf32> -> vector<64x128xf32>
    %c0_3 = arith.constant 0 : index
    %c0_4 = arith.constant 0 : index
    %3 = vector.load %arg3[%c0_3, %c0_4] : memref<1x128xf32, #tpu.memory_space<vmem>>, vector<1x128xf32>
    %4 = vector.broadcast %3 : vector<1x128xf32> to vector<64x128xf32>
    %5 = arith.addf %2, %4 : vector<64x128xf32>
    %c0_5 = arith.constant 0 : index
    %c0_6 = arith.constant 0 : index
    %6 = vector.load %arg10[%c0_5, %c0_6] : memref<64x128xf32, #tpu.memory_space<vmem>>, vector<64x128xf32>
    tpu.vector_store %arg10[%c0_5, %c0_6], %5 {strides = array<i32>} : memref<64x128xf32, #tpu.memory_space<vmem>>, vector<64x128xf32>,
    %c0_7 = arith.constant 0 : index
    %c0_8 = arith.constant 0 : index
    %7 = vector.load %arg4[%c0_7, %c0_8] : memref<64x256xf32, #tpu.memory_space<vmem>>, vector<64x256xf32>
    %c0_9 = arith.constant 0 : index
    %c0_10 = arith.constant 0 : index
    %8 = vector.load %arg5[%c0_9, %c0_10] : memref<32x128xf32, #tpu.memory_space<vmem>>, vector<32x128xf32>
    %c0_11 = arith.constant 0 : index
    %c0_12 = arith.constant 0 : index
    %9 = vector.load %arg6[%c0_11, %c0_12] : memref<1x128xf32, #tpu.memory_space<vmem>>, vector<1x128xf32>
    %cst_13 = arith.constant 0.000000e+00 : f32
    %10 = vector.broadcast %cst_13 : f32 to vector<8x64xf32>
    %cst_14 = arith.constant 0.000000e+00 : f32
    %11 = vector.broadcast %cst_14 : f32 to vector<8x32xf32>
    %cst_15 = arith.constant 0.000000e+00 : f32
    %12 = vector.broadcast %cst_15 : f32 to vector<8x32xf32>
    %cst_16 = arith.constant dense<0.000000e+00> : vector<8x256xf32>
    %13 = tpu.matmul %10, %7, %cst_16 {dimension_numbers = #tpu.dot_dimension_numbers<[1], [0], [0], [1], [0, 0, 1, 1], [], []>} : vector<8x64xf32>, vector<64x256xf32>, vector<8x256xf32> -> vector<8x256xf32>
    %c0_17 = arith.constant 0 : index
    %c0_18 = arith.constant 0 : index
    %14 = vector.load %arg10[%c0_17, %c0_18] : memref<64x128xf32, #tpu.memory_space<vmem>>, vector<8x128xf32>
    %15 = vector.extract_strided_slice %13 {offsets = [0, 0], sizes = [8, 128], strides = [1, 1]} : vector<8x256xf32> to vector<8x128xf32>
    %16 = arith.addf %14, %15 : vector<8x128xf32>
    %17 = vector.extract_strided_slice %16 {offsets = [0, 0], sizes = [8, 96], strides = [1, 1]} : vector<8x128xf32> to vector<8x96xf32>
    %18 = arith.negf %17 : vector<8x96xf32>
    %19 = math.exp %18 : vector<8x96xf32>
    %cst_19 = arith.constant 1.000000e+00 : f32
    %20 = vector.broadcast %cst_19 : f32 to vector<8x96xf32>
    %21 = arith.addf %20, %19 : vector<8x96xf32>
    %22 = arith.divf %20, %21 : vector<8x96xf32>
    %23 = vector.extract_strided_slice %16 {offsets = [0, 96], sizes = [8, 32], strides = [1, 1]} : vector<8x128xf32> to vector<8x32xf32>
    %24 = math.tanh %23 : vector<8x32xf32>
    %25 = vector.extract_strided_slice %22 {offsets = [0, 0], sizes = [8, 32], strides = [1, 1]} : vector<8x96xf32> to vector<8x32xf32>
    %26 = vector.extract_strided_slice %22 {offsets = [0, 32], sizes = [8, 32], strides = [1, 1]} : vector<8x96xf32> to vector<8x32xf32>
    %27 = vector.extract_strided_slice %22 {offsets = [0, 64], sizes = [8, 32], strides = [1, 1]} : vector<8x96xf32> to vector<8x32xf32>
    %28 = arith.mulf %26, %11 : vector<8x32xf32>
    %29 = arith.mulf %25, %24 : vector<8x32xf32>
    %30 = arith.addf %28, %29 : vector<8x32xf32>
    %31 = math.tanh %30 : vector<8x32xf32>
    %32 = arith.mulf %27, %31 : vector<8x32xf32>
    %cst_20 = arith.constant dense<0.000000e+00> : vector<8x128xf32>
    %33 = tpu.matmul %32, %8, %cst_20 {dimension_numbers = #tpu.dot_dimension_numbers<[1], [0], [0], [1], [0, 0, 1, 1], [], []>} : vector<8x32xf32>, vector<32x128xf32>, vector<8x128xf32> -> vector<8x128xf32>
    %34 = vector.extract_strided_slice %13 {offsets = [0, 128], sizes = [8, 128], strides = [1, 1]} : vector<8x256xf32> to vector<8x128xf32>
    %35 = arith.addf %33, %34 : vector<8x128xf32>
    %36 = vector.broadcast %9 : vector<1x128xf32> to vector<8x128xf32>
    %37 = arith.addf %35, %36 : vector<8x128xf32>
    %38 = vector.extract_strided_slice %37 {offsets = [0, 0], sizes = [8, 96], strides = [1, 1]} : vector<8x128xf32> to vector<8x96xf32>
    %39 = arith.negf %38 : vector<8x96xf32>
    %40 = math.exp %39 : vector<8x96xf32>
    %cst_21 = arith.constant 1.000000e+00 : f32
    %41 = vector.broadcast %cst_21 : f32 to vector<8x96xf32>
    %42 = arith.addf %41, %40 : vector<8x96xf32>
    %43 = arith.divf %41, %42 : vector<8x96xf32>
    %44 = vector.extract_strided_slice %37 {offsets = [0, 96], sizes = [8, 32], strides = [1, 1]} : vector<8x128xf32> to vector<8x32xf32>
    %45 = math.tanh %44 : vector<8x32xf32>
    %46 = vector.extract_strided_slice %43 {offsets = [0, 0], sizes = [8, 32], strides = [1, 1]} : vector<8x96xf32> to vector<8x32xf32>
    %47 = vector.extract_strided_slice %43 {offsets = [0, 32], sizes = [8, 32], strides = [1, 1]} : vector<8x96xf32> to vector<8x32xf32>
    %48 = vector.extract_strided_slice %43 {offsets = [0, 64], sizes = [8, 32], strides = [1, 1]} : vector<8x96xf32> to vector<8x32xf32>
    %49 = arith.mulf %47, %12 : vector<8x32xf32>
    %50 = arith.mulf %46, %45 : vector<8x32xf32>
    %51 = arith.addf %49, %50 : vector<8x32xf32>
    %52 = math.tanh %51 : vector<8x32xf32>
    %53 = arith.mulf %48, %52 : vector<8x32xf32>
    %c0_22 = arith.constant 0 : index
    %c0_23 = arith.constant 0 : index
    %54 = vector.load %arg11[%c0_22, %c0_23] : memref<64x32xf32, #tpu.memory_space<vmem>>, vector<8x32xf32>
    tpu.vector_store %arg11[%c0_22, %c0_23], %53 {strides = array<i32>} : memref<64x32xf32, #tpu.memory_space<vmem>>, vector<8x32xf32>,
    %55 = tpu.concatenate %32, %53 in 1 : vector<8x32xf32>, vector<8x32xf32> -> vector<8x64xf32>
    %cst_24 = arith.constant dense<0.000000e+00> : vector<8x256xf32>
    %56 = tpu.matmul %55, %7, %cst_24 {dimension_numbers = #tpu.dot_dimension_numbers<[1], [0], [0], [1], [0, 0, 1, 1], [], []>} : vector<8x64xf32>, vector<64x256xf32>, vector<8x256xf32> -> vector<8x256xf32>
    %c8 = arith.constant 8 : index
    %c0_25 = arith.constant 0 : index
    %57 = vector.load %arg10[%c8, %c0_25] : memref<64x128xf32, #tpu.memory_space<vmem>>, vector<8x128xf32>
    %58 = vector.extract_strided_slice %56 {offsets = [0, 0], sizes = [8, 128], strides = [1, 1]} : vector<8x256xf32> to vector<8x128xf32>
    %59 = arith.addf %57, %58 : vector<8x128xf32>
    %60 = vector.extract_strided_slice %59 {offsets = [0, 0], sizes = [8, 96], strides = [1, 1]} : vector<8x128xf32> to vector<8x96xf32>
    %61 = arith.negf %60 : vector<8x96xf32>
    %62 = math.exp %61 : vector<8x96xf32>
    %cst_26 = arith.constant 1.000000e+00 : f32
    %63 = vector.broadcast %cst_26 : f32 to vector<8x96xf32>
    %64 = arith.addf %63, %62 : vector<8x96xf32>
    %65 = arith.divf %63, %64 : vector<8x96xf32>
    %66 = vector.extract_strided_slice %59 {offsets = [0, 96], sizes = [8, 32], strides = [1, 1]} : vector<8x128xf32> to vector<8x32xf32>
    %67 = math.tanh %66 : vector<8x32xf32>
    %68 = vector.extract_strided_slice %65 {offsets = [0, 0], sizes = [8, 32], strides = [1, 1]} : vector<8x96xf32> to vector<8x32xf32>
    %69 = vector.extract_strided_slice %65 {offsets = [0, 32], sizes = [8, 32], strides = [1, 1]} : vector<8x96xf32> to vector<8x32xf32>
    %70 = vector.extract_strided_slice %65 {offsets = [0, 64], sizes = [8, 32], strides = [1, 1]} : vector<8x96xf32> to vector<8x32xf32>
    %71 = arith.mulf %69, %30 : vector<8x32xf32>
    %72 = arith.mulf %68, %67 : vector<8x32xf32>
    %73 = arith.addf %71, %72 : vector<8x32xf32>
    %74 = math.tanh %73 : vector<8x32xf32>
    %75 = arith.mulf %70, %74 : vector<8x32xf32>
    %cst_27 = arith.constant dense<0.000000e+00> : vector<8x128xf32>
    %76 = tpu.matmul %75, %8, %cst_27 {dimension_numbers = #tpu.dot_dimension_numbers<[1], [0], [0], [1], [0, 0, 1, 1], [], []>} : vector<8x32xf32>, vector<32x128xf32>, vector<8x128xf32> -> vector<8x128xf32>
    %77 = vector.extract_strided_slice %56 {offsets = [0, 128], sizes = [8, 128], strides = [1, 1]} : vector<8x256xf32> to vector<8x128xf32>
    %78 = arith.addf %76, %77 : vector<8x128xf32>
    %79 = vector.broadcast %9 : vector<1x128xf32> to vector<8x128xf32>
    %80 = arith.addf %78, %79 : vector<8x128xf32>
    %81 = vector.extract_strided_slice %80 {offsets = [0, 0], sizes = [8, 96], strides = [1, 1]} : vector<8x128xf32> to vector<8x96xf32>
    %82 = arith.negf %81 : vector<8x96xf32>
    %83 = math.exp %82 : vector<8x96xf32>
    %cst_28 = arith.constant 1.000000e+00 : f32
    %84 = vector.broadcast %cst_28 : f32 to vector<8x96xf32>
    %85 = arith.addf %84, %83 : vector<8x96xf32>
    %86 = arith.divf %84, %85 : vector<8x96xf32>
    %87 = vector.extract_strided_slice %80 {offsets = [0, 96], sizes = [8, 32], strides = [1, 1]} : vector<8x128xf32> to vector<8x32xf32>
    %88 = math.tanh %87 : vector<8x32xf32>
    %89 = vector.extract_strided_slice %86 {offsets = [0, 0], sizes = [8, 32], strides = [1, 1]} : vector<8x96xf32> to vector<8x32xf32>
    %90 = vector.extract_strided_slice %86 {offsets = [0, 32], sizes = [8, 32], strides = [1, 1]} : vector<8x96xf32> to vector<8x32xf32>
    %91 = vector.extract_strided_slice %86 {offsets = [0, 64], sizes = [8, 32], strides = [1, 1]} : vector<8x96xf32> to vector<8x32xf32>
    %92 = arith.mulf %90, %51 : vector<8x32xf32>
    %93 = arith.mulf %89, %88 : vector<8x32xf32>
    %94 = arith.addf %92, %93 : vector<8x32xf32>
    %95 = math.tanh %94 : vector<8x32xf32>
    %96 = arith.mulf %91, %95 : vector<8x32xf32>
    %c8_29 = arith.constant 8 : index
    %c0_30 = arith.constant 0 : index
    %97 = vector.load %arg11[%c8_29, %c0_30] : memref<64x32xf32, #tpu.memory_space<vmem>>, vector<8x32xf32>
    tpu.vector_store %arg11[%c8_29, %c0_30], %96 {strides = array<i32>} : memref<64x32xf32, #tpu.memory_space<vmem>>, vector<8x32xf32>,
    %98 = tpu.concatenate %75, %96 in 1 : vector<8x32xf32>, vector<8x32xf32> -> vector<8x64xf32>
    %cst_31 = arith.constant dense<0.000000e+00> : vector<8x256xf32>
    %99 = tpu.matmul %98, %7, %cst_31 {dimension_numbers = #tpu.dot_dimension_numbers<[1], [0], [0], [1], [0, 0, 1, 1], [], []>} : vector<8x64xf32>, vector<64x256xf32>, vector<8x256xf32> -> vector<8x256xf32>
    %c16 = arith.constant 16 : index
    %c0_32 = arith.constant 0 : index
    %100 = vector.load %arg10[%c16, %c0_32] : memref<64x128xf32, #tpu.memory_space<vmem>>, vector<8x128xf32>
    %101 = vector.extract_strided_slice %99 {offsets = [0, 0], sizes = [8, 128], strides = [1, 1]} : vector<8x256xf32> to vector<8x128xf32>
    %102 = arith.addf %100, %101 : vector<8x128xf32>
    %103 = vector.extract_strided_slice %102 {offsets = [0, 0], sizes = [8, 96], strides = [1, 1]} : vector<8x128xf32> to vector<8x96xf32>
    %104 = arith.negf %103 : vector<8x96xf32>
    %105 = math.exp %104 : vector<8x96xf32>
    %cst_33 = arith.constant 1.000000e+00 : f32
    %106 = vector.broadcast %cst_33 : f32 to vector<8x96xf32>
    %107 = arith.addf %106, %105 : vector<8x96xf32>
    %108 = arith.divf %106, %107 : vector<8x96xf32>
    %109 = vector.extract_strided_slice %102 {offsets = [0, 96], sizes = [8, 32], strides = [1, 1]} : vector<8x128xf32> to vector<8x32xf32>
    %110 = math.tanh %109 : vector<8x32xf32>
    %111 = vector.extract_strided_slice %108 {offsets = [0, 0], sizes = [8, 32], strides = [1, 1]} : vector<8x96xf32> to vector<8x32xf32>
    %112 = vector.extract_strided_slice %108 {offsets = [0, 32], sizes = [8, 32], strides = [1, 1]} : vector<8x96xf32> to vector<8x32xf32>
    %113 = vector.extract_strided_slice %108 {offsets = [0, 64], sizes = [8, 32], strides = [1, 1]} : vector<8x96xf32> to vector<8x32xf32>
    %114 = arith.mulf %112, %73 : vector<8x32xf32>
    %115 = arith.mulf %111, %110 : vector<8x32xf32>
    %116 = arith.addf %114, %115 : vector<8x32xf32>
    %117 = math.tanh %116 : vector<8x32xf32>
    %118 = arith.mulf %113, %117 : vector<8x32xf32>
    %cst_34 = arith.constant dense<0.000000e+00> : vector<8x128xf32>
    %119 = tpu.matmul %118, %8, %cst_34 {dimension_numbers = #tpu.dot_dimension_numbers<[1], [0], [0], [1], [0, 0, 1, 1], [], []>} : vector<8x32xf32>, vector<32x128xf32>, vector<8x128xf32> -> vector<8x128xf32>
    %120 = vector.extract_strided_slice %99 {offsets = [0, 128], sizes = [8, 128], strides = [1, 1]} : vector<8x256xf32> to vector<8x128xf32>
    %121 = arith.addf %119, %120 : vector<8x128xf32>
    %122 = vector.broadcast %9 : vector<1x128xf32> to vector<8x128xf32>
    %123 = arith.addf %121, %122 : vector<8x128xf32>
    %124 = vector.extract_strided_slice %123 {offsets = [0, 0], sizes = [8, 96], strides = [1, 1]} : vector<8x128xf32> to vector<8x96xf32>
    %125 = arith.negf %124 : vector<8x96xf32>
    %126 = math.exp %125 : vector<8x96xf32>
    %cst_35 = arith.constant 1.000000e+00 : f32
    %127 = vector.broadcast %cst_35 : f32 to vector<8x96xf32>
    %128 = arith.addf %127, %126 : vector<8x96xf32>
    %129 = arith.divf %127, %128 : vector<8x96xf32>
    %130 = vector.extract_strided_slice %123 {offsets = [0, 96], sizes = [8, 32], strides = [1, 1]} : vector<8x128xf32> to vector<8x32xf32>
    %131 = math.tanh %130 : vector<8x32xf32>
    %132 = vector.extract_strided_slice %129 {offsets = [0, 0], sizes = [8, 32], strides = [1, 1]} : vector<8x96xf32> to vector<8x32xf32>
    %133 = vector.extract_strided_slice %129 {offsets = [0, 32], sizes = [8, 32], strides = [1, 1]} : vector<8x96xf32> to vector<8x32xf32>
    %134 = vector.extract_strided_slice %129 {offsets = [0, 64], sizes = [8, 32], strides = [1, 1]} : vector<8x96xf32> to vector<8x32xf32>
    %135 = arith.mulf %133, %94 : vector<8x32xf32>
    %136 = arith.mulf %132, %131 : vector<8x32xf32>
    %137 = arith.addf %135, %136 : vector<8x32xf32>
    %138 = math.tanh %137 : vector<8x32xf32>
    %139 = arith.mulf %134, %138 : vector<8x32xf32>
    %c16_36 = arith.constant 16 : index
    %c0_37 = arith.constant 0 : index
    %140 = vector.load %arg11[%c16_36, %c0_37] : memref<64x32xf32, #tpu.memory_space<vmem>>, vector<8x32xf32>
    tpu.vector_store %arg11[%c16_36, %c0_37], %139 {strides = array<i32>} : memref<64x32xf32, #tpu.memory_space<vmem>>, vector<8x32xf32>,
    %141 = tpu.concatenate %118, %139 in 1 : vector<8x32xf32>, vector<8x32xf32> -> vector<8x64xf32>
    %cst_38 = arith.constant dense<0.000000e+00> : vector<8x256xf32>
    %142 = tpu.matmul %141, %7, %cst_38 {dimension_numbers = #tpu.dot_dimension_numbers<[1], [0], [0], [1], [0, 0, 1, 1], [], []>} : vector<8x64xf32>, vector<64x256xf32>, vector<8x256xf32> -> vector<8x256xf32>
    %c24 = arith.constant 24 : index
    %c0_39 = arith.constant 0 : index
    %143 = vector.load %arg10[%c24, %c0_39] : memref<64x128xf32, #tpu.memory_space<vmem>>, vector<8x128xf32>
    %144 = vector.extract_strided_slice %142 {offsets = [0, 0], sizes = [8, 128], strides = [1, 1]} : vector<8x256xf32> to vector<8x128xf32>
    %145 = arith.addf %143, %144 : vector<8x128xf32>
    %146 = vector.extract_strided_slice %145 {offsets = [0, 0], sizes = [8, 96], strides = [1, 1]} : vector<8x128xf32> to vector<8x96xf32>
    %147 = arith.negf %146 : vector<8x96xf32>
    %148 = math.exp %147 : vector<8x96xf32>
    %cst_40 = arith.constant 1.000000e+00 : f32
    %149 = vector.broadcast %cst_40 : f32 to vector<8x96xf32>
    %150 = arith.addf %149, %148 : vector<8x96xf32>
    %151 = arith.divf %149, %150 : vector<8x96xf32>
    %152 = vector.extract_strided_slice %145 {offsets = [0, 96], sizes = [8, 32], strides = [1, 1]} : vector<8x128xf32> to vector<8x32xf32>
    %153 = math.tanh %152 : vector<8x32xf32>
    %154 = vector.extract_strided_slice %151 {offsets = [0, 0], sizes = [8, 32], strides = [1, 1]} : vector<8x96xf32> to vector<8x32xf32>
    %155 = vector.extract_strided_slice %151 {offsets = [0, 32], sizes = [8, 32], strides = [1, 1]} : vector<8x96xf32> to vector<8x32xf32>
    %156 = vector.extract_strided_slice %151 {offsets = [0, 64], sizes = [8, 32], strides = [1, 1]} : vector<8x96xf32> to vector<8x32xf32>
    %157 = arith.mulf %155, %116 : vector<8x32xf32>
    %158 = arith.mulf %154, %153 : vector<8x32xf32>
    %159 = arith.addf %157, %158 : vector<8x32xf32>
    %160 = math.tanh %159 : vector<8x32xf32>
    %161 = arith.mulf %156, %160 : vector<8x32xf32>
    %cst_41 = arith.constant dense<0.000000e+00> : vector<8x128xf32>
    %162 = tpu.matmul %161, %8, %cst_41 {dimension_numbers = #tpu.dot_dimension_numbers<[1], [0], [0], [1], [0, 0, 1, 1], [], []>} : vector<8x32xf32>, vector<32x128xf32>, vector<8x128xf32> -> vector<8x128xf32>
    %163 = vector.extract_strided_slice %142 {offsets = [0, 128], sizes = [8, 128], strides = [1, 1]} : vector<8x256xf32> to vector<8x128xf32>
    %164 = arith.addf %162, %163 : vector<8x128xf32>
    %165 = vector.broadcast %9 : vector<1x128xf32> to vector<8x128xf32>
    %166 = arith.addf %164, %165 : vector<8x128xf32>
    %167 = vector.extract_strided_slice %166 {offsets = [0, 0], sizes = [8, 96], strides = [1, 1]} : vector<8x128xf32> to vector<8x96xf32>
    %168 = arith.negf %167 : vector<8x96xf32>
    %169 = math.exp %168 : vector<8x96xf32>
    %cst_42 = arith.constant 1.000000e+00 : f32
    %170 = vector.broadcast %cst_42 : f32 to vector<8x96xf32>
    %171 = arith.addf %170, %169 : vector<8x96xf32>
    %172 = arith.divf %170, %171 : vector<8x96xf32>
    %173 = vector.extract_strided_slice %166 {offsets = [0, 96], sizes = [8, 32], strides = [1, 1]} : vector<8x128xf32> to vector<8x32xf32>
    %174 = math.tanh %173 : vector<8x32xf32>
    %175 = vector.extract_strided_slice %172 {offsets = [0, 0], sizes = [8, 32], strides = [1, 1]} : vector<8x96xf32> to vector<8x32xf32>
    %176 = vector.extract_strided_slice %172 {offsets = [0, 32], sizes = [8, 32], strides = [1, 1]} : vector<8x96xf32> to vector<8x32xf32>
    %177 = vector.extract_strided_slice %172 {offsets = [0, 64], sizes = [8, 32], strides = [1, 1]} : vector<8x96xf32> to vector<8x32xf32>
    %178 = arith.mulf %176, %137 : vector<8x32xf32>
    %179 = arith.mulf %175, %174 : vector<8x32xf32>
    %180 = arith.addf %178, %179 : vector<8x32xf32>
    %181 = math.tanh %180 : vector<8x32xf32>
    %182 = arith.mulf %177, %181 : vector<8x32xf32>
    %c24_43 = arith.constant 24 : index
    %c0_44 = arith.constant 0 : index
    %183 = vector.load %arg11[%c24_43, %c0_44] : memref<64x32xf32, #tpu.memory_space<vmem>>, vector<8x32xf32>
    tpu.vector_store %arg11[%c24_43, %c0_44], %182 {strides = array<i32>} : memref<64x32xf32, #tpu.memory_space<vmem>>, vector<8x32xf32>,
    %184 = tpu.concatenate %161, %182 in 1 : vector<8x32xf32>, vector<8x32xf32> -> vector<8x64xf32>
    %cst_45 = arith.constant dense<0.000000e+00> : vector<8x256xf32>
    %185 = tpu.matmul %184, %7, %cst_45 {dimension_numbers = #tpu.dot_dimension_numbers<[1], [0], [0], [1], [0, 0, 1, 1], [], []>} : vector<8x64xf32>, vector<64x256xf32>, vector<8x256xf32> -> vector<8x256xf32>
    %c32 = arith.constant 32 : index
    %c0_46 = arith.constant 0 : index
    %186 = vector.load %arg10[%c32, %c0_46] : memref<64x128xf32, #tpu.memory_space<vmem>>, vector<8x128xf32>
    %187 = vector.extract_strided_slice %185 {offsets = [0, 0], sizes = [8, 128], strides = [1, 1]} : vector<8x256xf32> to vector<8x128xf32>
    %188 = arith.addf %186, %187 : vector<8x128xf32>
    %189 = vector.extract_strided_slice %188 {offsets = [0, 0], sizes = [8, 96], strides = [1, 1]} : vector<8x128xf32> to vector<8x96xf32>
    %190 = arith.negf %189 : vector<8x96xf32>
    %191 = math.exp %190 : vector<8x96xf32>
    %cst_47 = arith.constant 1.000000e+00 : f32
    %192 = vector.broadcast %cst_47 : f32 to vector<8x96xf32>
    %193 = arith.addf %192, %191 : vector<8x96xf32>
    %194 = arith.divf %192, %193 : vector<8x96xf32>
    %195 = vector.extract_strided_slice %188 {offsets = [0, 96], sizes = [8, 32], strides = [1, 1]} : vector<8x128xf32> to vector<8x32xf32>
    %196 = math.tanh %195 : vector<8x32xf32>
    %197 = vector.extract_strided_slice %194 {offsets = [0, 0], sizes = [8, 32], strides = [1, 1]} : vector<8x96xf32> to vector<8x32xf32>
    %198 = vector.extract_strided_slice %194 {offsets = [0, 32], sizes = [8, 32], strides = [1, 1]} : vector<8x96xf32> to vector<8x32xf32>
    %199 = vector.extract_strided_slice %194 {offsets = [0, 64], sizes = [8, 32], strides = [1, 1]} : vector<8x96xf32> to vector<8x32xf32>
    %200 = arith.mulf %198, %159 : vector<8x32xf32>
    %201 = arith.mulf %197, %196 : vector<8x32xf32>
    %202 = arith.addf %200, %201 : vector<8x32xf32>
    %203 = math.tanh %202 : vector<8x32xf32>
    %204 = arith.mulf %199, %203 : vector<8x32xf32>
    %cst_48 = arith.constant dense<0.000000e+00> : vector<8x128xf32>
    %205 = tpu.matmul %204, %8, %cst_48 {dimension_numbers = #tpu.dot_dimension_numbers<[1], [0], [0], [1], [0, 0, 1, 1], [], []>} : vector<8x32xf32>, vector<32x128xf32>, vector<8x128xf32> -> vector<8x128xf32>
    %206 = vector.extract_strided_slice %185 {offsets = [0, 128], sizes = [8, 128], strides = [1, 1]} : vector<8x256xf32> to vector<8x128xf32>
    %207 = arith.addf %205, %206 : vector<8x128xf32>
    %208 = vector.broadcast %9 : vector<1x128xf32> to vector<8x128xf32>
    %209 = arith.addf %207, %208 : vector<8x128xf32>
    %210 = vector.extract_strided_slice %209 {offsets = [0, 0], sizes = [8, 96], strides = [1, 1]} : vector<8x128xf32> to vector<8x96xf32>
    %211 = arith.negf %210 : vector<8x96xf32>
    %212 = math.exp %211 : vector<8x96xf32>
    %cst_49 = arith.constant 1.000000e+00 : f32
    %213 = vector.broadcast %cst_49 : f32 to vector<8x96xf32>
    %214 = arith.addf %213, %212 : vector<8x96xf32>
    %215 = arith.divf %213, %214 : vector<8x96xf32>
    %216 = vector.extract_strided_slice %209 {offsets = [0, 96], sizes = [8, 32], strides = [1, 1]} : vector<8x128xf32> to vector<8x32xf32>
    %217 = math.tanh %216 : vector<8x32xf32>
    %218 = vector.extract_strided_slice %215 {offsets = [0, 0], sizes = [8, 32], strides = [1, 1]} : vector<8x96xf32> to vector<8x32xf32>
    %219 = vector.extract_strided_slice %215 {offsets = [0, 32], sizes = [8, 32], strides = [1, 1]} : vector<8x96xf32> to vector<8x32xf32>
    %220 = vector.extract_strided_slice %215 {offsets = [0, 64], sizes = [8, 32], strides = [1, 1]} : vector<8x96xf32> to vector<8x32xf32>
    %221 = arith.mulf %219, %180 : vector<8x32xf32>
    %222 = arith.mulf %218, %217 : vector<8x32xf32>
    %223 = arith.addf %221, %222 : vector<8x32xf32>
    %224 = math.tanh %223 : vector<8x32xf32>
    %225 = arith.mulf %220, %224 : vector<8x32xf32>
    %c32_50 = arith.constant 32 : index
    %c0_51 = arith.constant 0 : index
    %226 = vector.load %arg11[%c32_50, %c0_51] : memref<64x32xf32, #tpu.memory_space<vmem>>, vector<8x32xf32>
    tpu.vector_store %arg11[%c32_50, %c0_51], %225 {strides = array<i32>} : memref<64x32xf32, #tpu.memory_space<vmem>>, vector<8x32xf32>,
    %227 = tpu.concatenate %204, %225 in 1 : vector<8x32xf32>, vector<8x32xf32> -> vector<8x64xf32>
    %cst_52 = arith.constant dense<0.000000e+00> : vector<8x256xf32>
    %228 = tpu.matmul %227, %7, %cst_52 {dimension_numbers = #tpu.dot_dimension_numbers<[1], [0], [0], [1], [0, 0, 1, 1], [], []>} : vector<8x64xf32>, vector<64x256xf32>, vector<8x256xf32> -> vector<8x256xf32>
    %c40 = arith.constant 40 : index
    %c0_53 = arith.constant 0 : index
    %229 = vector.load %arg10[%c40, %c0_53] : memref<64x128xf32, #tpu.memory_space<vmem>>, vector<8x128xf32>
    %230 = vector.extract_strided_slice %228 {offsets = [0, 0], sizes = [8, 128], strides = [1, 1]} : vector<8x256xf32> to vector<8x128xf32>
    %231 = arith.addf %229, %230 : vector<8x128xf32>
    %232 = vector.extract_strided_slice %231 {offsets = [0, 0], sizes = [8, 96], strides = [1, 1]} : vector<8x128xf32> to vector<8x96xf32>
    %233 = arith.negf %232 : vector<8x96xf32>
    %234 = math.exp %233 : vector<8x96xf32>
    %cst_54 = arith.constant 1.000000e+00 : f32
    %235 = vector.broadcast %cst_54 : f32 to vector<8x96xf32>
    %236 = arith.addf %235, %234 : vector<8x96xf32>
    %237 = arith.divf %235, %236 : vector<8x96xf32>
    %238 = vector.extract_strided_slice %231 {offsets = [0, 96], sizes = [8, 32], strides = [1, 1]} : vector<8x128xf32> to vector<8x32xf32>
    %239 = math.tanh %238 : vector<8x32xf32>
    %240 = vector.extract_strided_slice %237 {offsets = [0, 0], sizes = [8, 32], strides = [1, 1]} : vector<8x96xf32> to vector<8x32xf32>
    %241 = vector.extract_strided_slice %237 {offsets = [0, 32], sizes = [8, 32], strides = [1, 1]} : vector<8x96xf32> to vector<8x32xf32>
    %242 = vector.extract_strided_slice %237 {offsets = [0, 64], sizes = [8, 32], strides = [1, 1]} : vector<8x96xf32> to vector<8x32xf32>
    %243 = arith.mulf %241, %202 : vector<8x32xf32>
    %244 = arith.mulf %240, %239 : vector<8x32xf32>
    %245 = arith.addf %243, %244 : vector<8x32xf32>
    %246 = math.tanh %245 : vector<8x32xf32>
    %247 = arith.mulf %242, %246 : vector<8x32xf32>
    %cst_55 = arith.constant dense<0.000000e+00> : vector<8x128xf32>
    %248 = tpu.matmul %247, %8, %cst_55 {dimension_numbers = #tpu.dot_dimension_numbers<[1], [0], [0], [1], [0, 0, 1, 1], [], []>} : vector<8x32xf32>, vector<32x128xf32>, vector<8x128xf32> -> vector<8x128xf32>
    %249 = vector.extract_strided_slice %228 {offsets = [0, 128], sizes = [8, 128], strides = [1, 1]} : vector<8x256xf32> to vector<8x128xf32>
    %250 = arith.addf %248, %249 : vector<8x128xf32>
    %251 = vector.broadcast %9 : vector<1x128xf32> to vector<8x128xf32>
    %252 = arith.addf %250, %251 : vector<8x128xf32>
    %253 = vector.extract_strided_slice %252 {offsets = [0, 0], sizes = [8, 96], strides = [1, 1]} : vector<8x128xf32> to vector<8x96xf32>
    %254 = arith.negf %253 : vector<8x96xf32>
    %255 = math.exp %254 : vector<8x96xf32>
    %cst_56 = arith.constant 1.000000e+00 : f32
    %256 = vector.broadcast %cst_56 : f32 to vector<8x96xf32>
    %257 = arith.addf %256, %255 : vector<8x96xf32>
    %258 = arith.divf %256, %257 : vector<8x96xf32>
    %259 = vector.extract_strided_slice %252 {offsets = [0, 96], sizes = [8, 32], strides = [1, 1]} : vector<8x128xf32> to vector<8x32xf32>
    %260 = math.tanh %259 : vector<8x32xf32>
    %261 = vector.extract_strided_slice %258 {offsets = [0, 0], sizes = [8, 32], strides = [1, 1]} : vector<8x96xf32> to vector<8x32xf32>
    %262 = vector.extract_strided_slice %258 {offsets = [0, 32], sizes = [8, 32], strides = [1, 1]} : vector<8x96xf32> to vector<8x32xf32>
    %263 = vector.extract_strided_slice %258 {offsets = [0, 64], sizes = [8, 32], strides = [1, 1]} : vector<8x96xf32> to vector<8x32xf32>
    %264 = arith.mulf %262, %223 : vector<8x32xf32>
    %265 = arith.mulf %261, %260 : vector<8x32xf32>
    %266 = arith.addf %264, %265 : vector<8x32xf32>
    %267 = math.tanh %266 : vector<8x32xf32>
    %268 = arith.mulf %263, %267 : vector<8x32xf32>
    %c40_57 = arith.constant 40 : index
    %c0_58 = arith.constant 0 : index
    %269 = vector.load %arg11[%c40_57, %c0_58] : memref<64x32xf32, #tpu.memory_space<vmem>>, vector<8x32xf32>
    tpu.vector_store %arg11[%c40_57, %c0_58], %268 {strides = array<i32>} : memref<64x32xf32, #tpu.memory_space<vmem>>, vector<8x32xf32>,
    %270 = tpu.concatenate %247, %268 in 1 : vector<8x32xf32>, vector<8x32xf32> -> vector<8x64xf32>
    %cst_59 = arith.constant dense<0.000000e+00> : vector<8x256xf32>
    %271 = tpu.matmul %270, %7, %cst_59 {dimension_numbers = #tpu.dot_dimension_numbers<[1], [0], [0], [1], [0, 0, 1, 1], [], []>} : vector<8x64xf32>, vector<64x256xf32>, vector<8x256xf32> -> vector<8x256xf32>
    %c48 = arith.constant 48 : index
    %c0_60 = arith.constant 0 : index
    %272 = vector.load %arg10[%c48, %c0_60] : memref<64x128xf32, #tpu.memory_space<vmem>>, vector<8x128xf32>
    %273 = vector.extract_strided_slice %271 {offsets = [0, 0], sizes = [8, 128], strides = [1, 1]} : vector<8x256xf32> to vector<8x128xf32>
    %274 = arith.addf %272, %273 : vector<8x128xf32>
    %275 = vector.extract_strided_slice %274 {offsets = [0, 0], sizes = [8, 96], strides = [1, 1]} : vector<8x128xf32> to vector<8x96xf32>
    %276 = arith.negf %275 : vector<8x96xf32>
    %277 = math.exp %276 : vector<8x96xf32>
    %cst_61 = arith.constant 1.000000e+00 : f32
    %278 = vector.broadcast %cst_61 : f32 to vector<8x96xf32>
    %279 = arith.addf %278, %277 : vector<8x96xf32>
    %280 = arith.divf %278, %279 : vector<8x96xf32>
    %281 = vector.extract_strided_slice %274 {offsets = [0, 96], sizes = [8, 32], strides = [1, 1]} : vector<8x128xf32> to vector<8x32xf32>
    %282 = math.tanh %281 : vector<8x32xf32>
    %283 = vector.extract_strided_slice %280 {offsets = [0, 0], sizes = [8, 32], strides = [1, 1]} : vector<8x96xf32> to vector<8x32xf32>
    %284 = vector.extract_strided_slice %280 {offsets = [0, 32], sizes = [8, 32], strides = [1, 1]} : vector<8x96xf32> to vector<8x32xf32>
    %285 = vector.extract_strided_slice %280 {offsets = [0, 64], sizes = [8, 32], strides = [1, 1]} : vector<8x96xf32> to vector<8x32xf32>
    %286 = arith.mulf %284, %245 : vector<8x32xf32>
    %287 = arith.mulf %283, %282 : vector<8x32xf32>
    %288 = arith.addf %286, %287 : vector<8x32xf32>
    %289 = math.tanh %288 : vector<8x32xf32>
    %290 = arith.mulf %285, %289 : vector<8x32xf32>
    %cst_62 = arith.constant dense<0.000000e+00> : vector<8x128xf32>
    %291 = tpu.matmul %290, %8, %cst_62 {dimension_numbers = #tpu.dot_dimension_numbers<[1], [0], [0], [1], [0, 0, 1, 1], [], []>} : vector<8x32xf32>, vector<32x128xf32>, vector<8x128xf32> -> vector<8x128xf32>
    %292 = vector.extract_strided_slice %271 {offsets = [0, 128], sizes = [8, 128], strides = [1, 1]} : vector<8x256xf32> to vector<8x128xf32>
    %293 = arith.addf %291, %292 : vector<8x128xf32>
    %294 = vector.broadcast %9 : vector<1x128xf32> to vector<8x128xf32>
    %295 = arith.addf %293, %294 : vector<8x128xf32>
    %296 = vector.extract_strided_slice %295 {offsets = [0, 0], sizes = [8, 96], strides = [1, 1]} : vector<8x128xf32> to vector<8x96xf32>
    %297 = arith.negf %296 : vector<8x96xf32>
    %298 = math.exp %297 : vector<8x96xf32>
    %cst_63 = arith.constant 1.000000e+00 : f32
    %299 = vector.broadcast %cst_63 : f32 to vector<8x96xf32>
    %300 = arith.addf %299, %298 : vector<8x96xf32>
    %301 = arith.divf %299, %300 : vector<8x96xf32>
    %302 = vector.extract_strided_slice %295 {offsets = [0, 96], sizes = [8, 32], strides = [1, 1]} : vector<8x128xf32> to vector<8x32xf32>
    %303 = math.tanh %302 : vector<8x32xf32>
    %304 = vector.extract_strided_slice %301 {offsets = [0, 0], sizes = [8, 32], strides = [1, 1]} : vector<8x96xf32> to vector<8x32xf32>
    %305 = vector.extract_strided_slice %301 {offsets = [0, 32], sizes = [8, 32], strides = [1, 1]} : vector<8x96xf32> to vector<8x32xf32>
    %306 = vector.extract_strided_slice %301 {offsets = [0, 64], sizes = [8, 32], strides = [1, 1]} : vector<8x96xf32> to vector<8x32xf32>
    %307 = arith.mulf %305, %266 : vector<8x32xf32>
    %308 = arith.mulf %304, %303 : vector<8x32xf32>
    %309 = arith.addf %307, %308 : vector<8x32xf32>
    %310 = math.tanh %309 : vector<8x32xf32>
    %311 = arith.mulf %306, %310 : vector<8x32xf32>
    %c48_64 = arith.constant 48 : index
    %c0_65 = arith.constant 0 : index
    %312 = vector.load %arg11[%c48_64, %c0_65] : memref<64x32xf32, #tpu.memory_space<vmem>>, vector<8x32xf32>
    tpu.vector_store %arg11[%c48_64, %c0_65], %311 {strides = array<i32>} : memref<64x32xf32, #tpu.memory_space<vmem>>, vector<8x32xf32>,
    %313 = tpu.concatenate %290, %311 in 1 : vector<8x32xf32>, vector<8x32xf32> -> vector<8x64xf32>
    %cst_66 = arith.constant dense<0.000000e+00> : vector<8x256xf32>
    %314 = tpu.matmul %313, %7, %cst_66 {dimension_numbers = #tpu.dot_dimension_numbers<[1], [0], [0], [1], [0, 0, 1, 1], [], []>} : vector<8x64xf32>, vector<64x256xf32>, vector<8x256xf32> -> vector<8x256xf32>
    %c56 = arith.constant 56 : index
    %c0_67 = arith.constant 0 : index
    %315 = vector.load %arg10[%c56, %c0_67] : memref<64x128xf32, #tpu.memory_space<vmem>>, vector<8x128xf32>
    %316 = vector.extract_strided_slice %314 {offsets = [0, 0], sizes = [8, 128], strides = [1, 1]} : vector<8x256xf32> to vector<8x128xf32>
    %317 = arith.addf %315, %316 : vector<8x128xf32>
    %318 = vector.extract_strided_slice %317 {offsets = [0, 0], sizes = [8, 96], strides = [1, 1]} : vector<8x128xf32> to vector<8x96xf32>
    %319 = arith.negf %318 : vector<8x96xf32>
    %320 = math.exp %319 : vector<8x96xf32>
    %cst_68 = arith.constant 1.000000e+00 : f32
    %321 = vector.broadcast %cst_68 : f32 to vector<8x96xf32>
    %322 = arith.addf %321, %320 : vector<8x96xf32>
    %323 = arith.divf %321, %322 : vector<8x96xf32>
    %324 = vector.extract_strided_slice %317 {offsets = [0, 96], sizes = [8, 32], strides = [1, 1]} : vector<8x128xf32> to vector<8x32xf32>
    %325 = math.tanh %324 : vector<8x32xf32>
    %326 = vector.extract_strided_slice %323 {offsets = [0, 0], sizes = [8, 32], strides = [1, 1]} : vector<8x96xf32> to vector<8x32xf32>
    %327 = vector.extract_strided_slice %323 {offsets = [0, 32], sizes = [8, 32], strides = [1, 1]} : vector<8x96xf32> to vector<8x32xf32>
    %328 = vector.extract_strided_slice %323 {offsets = [0, 64], sizes = [8, 32], strides = [1, 1]} : vector<8x96xf32> to vector<8x32xf32>
    %329 = arith.mulf %327, %288 : vector<8x32xf32>
    %330 = arith.mulf %326, %325 : vector<8x32xf32>
    %331 = arith.addf %329, %330 : vector<8x32xf32>
    %332 = math.tanh %331 : vector<8x32xf32>
    %333 = arith.mulf %328, %332 : vector<8x32xf32>
    %cst_69 = arith.constant dense<0.000000e+00> : vector<8x128xf32>
    %334 = tpu.matmul %333, %8, %cst_69 {dimension_numbers = #tpu.dot_dimension_numbers<[1], [0], [0], [1], [0, 0, 1, 1], [], []>} : vector<8x32xf32>, vector<32x128xf32>, vector<8x128xf32> -> vector<8x128xf32>
    %335 = vector.extract_strided_slice %314 {offsets = [0, 128], sizes = [8, 128], strides = [1, 1]} : vector<8x256xf32> to vector<8x128xf32>
    %336 = arith.addf %334, %335 : vector<8x128xf32>
    %337 = vector.broadcast %9 : vector<1x128xf32> to vector<8x128xf32>
    %338 = arith.addf %336, %337 : vector<8x128xf32>
    %339 = vector.extract_strided_slice %338 {offsets = [0, 0], sizes = [8, 96], strides = [1, 1]} : vector<8x128xf32> to vector<8x96xf32>
    %340 = arith.negf %339 : vector<8x96xf32>
    %341 = math.exp %340 : vector<8x96xf32>
    %cst_70 = arith.constant 1.000000e+00 : f32
    %342 = vector.broadcast %cst_70 : f32 to vector<8x96xf32>
    %343 = arith.addf %342, %341 : vector<8x96xf32>
    %344 = arith.divf %342, %343 : vector<8x96xf32>
    %345 = vector.extract_strided_slice %338 {offsets = [0, 96], sizes = [8, 32], strides = [1, 1]} : vector<8x128xf32> to vector<8x32xf32>
    %346 = math.tanh %345 : vector<8x32xf32>
    %347 = vector.extract_strided_slice %344 {offsets = [0, 0], sizes = [8, 32], strides = [1, 1]} : vector<8x96xf32> to vector<8x32xf32>
    %348 = vector.extract_strided_slice %344 {offsets = [0, 32], sizes = [8, 32], strides = [1, 1]} : vector<8x96xf32> to vector<8x32xf32>
    %349 = vector.extract_strided_slice %344 {offsets = [0, 64], sizes = [8, 32], strides = [1, 1]} : vector<8x96xf32> to vector<8x32xf32>
    %350 = arith.mulf %348, %309 : vector<8x32xf32>
    %351 = arith.mulf %347, %346 : vector<8x32xf32>
    %352 = arith.addf %350, %351 : vector<8x32xf32>
    %353 = math.tanh %352 : vector<8x32xf32>
    %354 = arith.mulf %349, %353 : vector<8x32xf32>
    %c56_71 = arith.constant 56 : index
    %c0_72 = arith.constant 0 : index
    %355 = vector.load %arg11[%c56_71, %c0_72] : memref<64x32xf32, #tpu.memory_space<vmem>>, vector<8x32xf32>
    tpu.vector_store %arg11[%c56_71, %c0_72], %354 {strides = array<i32>} : memref<64x32xf32, #tpu.memory_space<vmem>>, vector<8x32xf32>,
    %c0_73 = arith.constant 0 : index
    %c0_74 = arith.constant 0 : index
    %356 = vector.load %arg11[%c0_73, %c0_74] : memref<64x32xf32, #tpu.memory_space<vmem>>, vector<64x32xf32>
    %c0_75 = arith.constant 0 : index
    %c0_76 = arith.constant 0 : index
    %357 = vector.load %arg7[%c0_75, %c0_76] : memref<32x128xf32, #tpu.memory_space<vmem>>, vector<32x128xf32>
    %cst_77 = arith.constant dense<0.000000e+00> : vector<64x128xf32>
    %358 = tpu.matmul %356, %357, %cst_77 {dimension_numbers = #tpu.dot_dimension_numbers<[1], [0], [0], [1], [0, 0, 1, 1], [], []>} : vector<64x32xf32>, vector<32x128xf32>, vector<64x128xf32> -> vector<64x128xf32>
    %c0_78 = arith.constant 0 : index
    %c0_79 = arith.constant 0 : index
    %359 = vector.load %arg8[%c0_78, %c0_79] : memref<1x128xf32, #tpu.memory_space<vmem>>, vector<1x128xf32>
    %360 = vector.broadcast %359 : vector<1x128xf32> to vector<64x128xf32>
    %361 = arith.addf %358, %360 : vector<64x128xf32>
    %c0_80 = arith.constant 0 : index
    %c0_81 = arith.constant 0 : index
    %362 = vector.load %arg9[%c0_80, %c0_81] : memref<64x128xf32, #tpu.memory_space<vmem>>, vector<64x128xf32>
    tpu.vector_store %arg9[%c0_80, %c0_81], %361 {strides = array<i32>} : memref<64x128xf32, #tpu.memory_space<vmem>>, vector<64x128xf32>,
    return
  }
  func.func @transform_0(%arg0: i32) -> (i32, i32) {
    %c0_i32 = arith.constant 0 : i32
    %c0_i32_0 = arith.constant 0 : i32
    return %arg0, %c0_i32 : i32, i32
  }
  func.func @transform_1(%arg0: i32) -> (i32, i32) {
    %c0_i32 = arith.constant 0 : i32
    %c0_i32_0 = arith.constant 0 : i32
    %c0_i32_1 = arith.constant 0 : i32
    return %c0_i32, %c0_i32_0 : i32, i32
  }
  func.func @transform_2(%arg0: i32) -> (i32, i32) {
    %c0_i32 = arith.constant 0 : i32
    %c0_i32_0 = arith.constant 0 : i32
    %c0_i32_1 = arith.constant 0 : i32
    return %c0_i32, %c0_i32_0 : i32, i32
  }
  func.func @transform_3(%arg0: i32) -> (i32, i32) {
    %c0_i32 = arith.constant 0 : i32
    %c0_i32_0 = arith.constant 0 : i32
    %c0_i32_1 = arith.constant 0 : i32
    return %c0_i32, %c0_i32_0 : i32, i32
  }
  func.func @transform_4(%arg0: i32) -> (i32, i32) {
    %c0_i32 = arith.constant 0 : i32
    %c0_i32_0 = arith.constant 0 : i32
    %c0_i32_1 = arith.constant 0 : i32
    return %c0_i32, %c0_i32_0 : i32, i32
  }
  func.func @transform_5(%arg0: i32) -> (i32, i32) {
    %c0_i32 = arith.constant 0 : i32
    %c0_i32_0 = arith.constant 0 : i32
    %c0_i32_1 = arith.constant 0 : i32
    return %c0_i32, %c0_i32_0 : i32, i32
  }
  func.func @transform_6(%arg0: i32) -> (i32, i32) {
    %c0_i32 = arith.constant 0 : i32
    %c0_i32_0 = arith.constant 0 : i32
    %c0_i32_1 = arith.constant 0 : i32
    return %c0_i32, %c0_i32_0 : i32, i32
  }
  func.func @transform_7(%arg0: i32) -> (i32, i32) {
    %c0_i32 = arith.constant 0 : i32
    %c0_i32_0 = arith.constant 0 : i32
    %c0_i32_1 = arith.constant 0 : i32
    return %c0_i32, %c0_i32_0 : i32, i32
  }
  func.func @transform_8(%arg0: i32) -> (i32, i32) {
    %c0_i32 = arith.constant 0 : i32
    %c0_i32_0 = arith.constant 0 : i32
    return %arg0, %c0_i32 : i32, i32
  }
}

</mosaic_0001>

<llo_original>
// kernel: tpu_custom_call.1
$region0: #{tpu_custom_call.1}
  #allocation0 [shape = 'u32[]', space=smem, size = 0x4, offset = 0x4, fixed_abs, tag = 'smem constant byte address 0x4 - core index']
  #allocation1 [shape = 'u32[144,128]{1,0:T(1,128)}', space=vmem, size = 0x12000, scoped, tag = 'internal scratch']
  #allocation2 [shape = 'f32[64,128]{1,0:T(8,128)}', space=vmem, size = 0x8000, scoped, tag = 'scratch operand']
  #allocation3 [shape = 'f32[64,32]{1,0:T(8,128)}', space=vmem, size = 0x8000, scoped, tag = 'scratch operand']
  %s0 = inlined_call_operand.vmem [shape: f32[64,16], index: 0, kind: input, shape index: {}]
  %s1 = inlined_call_operand.vmem [shape: f32[16,128], index: 1, kind: input, shape index: {}]
  %s2 = inlined_call_operand.vmem [shape: f32[1,128], index: 2, kind: input, shape index: {}]
  %s3 = inlined_call_operand.hbm [shape: f32[64,256], index: 3, kind: input, shape index: {}]
  %s4 = inlined_call_operand.vmem [shape: f32[32,128], index: 4, kind: input, shape index: {}]
  %s5 = inlined_call_operand.vmem [shape: f32[1,128], index: 5, kind: input, shape index: {}]
  %s6 = inlined_call_operand.vmem [shape: f32[32,128], index: 6, kind: input, shape index: {}]
  %s7 = inlined_call_operand.vmem [shape: f32[1,128], index: 7, kind: input, shape index: {}]
  %s8 = inlined_call_operand.hbm [shape: f32[64,128], index: 8, kind: output, shape index: {}]
  %s9 = sld [smem:[#allocation0]]
  $region46: #{tpu_custom_call.1} parent=0
    _
  %s11 = ssub.s32 1, %s9
  %s12 = scalar_select 0, %s11, %s9
  $region1: #{tpu_custom_call.1} parent=0
    #allocation4 [shape = 'u8[65536]{0}', space=vmem, size = 0x10000, scoped, tag = 'input window, operand 3, single buffered']
    #allocation5 [shape = 's32[1]{0}', space=sflag, size = 0x4, scoped, tag = 'scoped memory for tpu_custom_call.1']
    #allocation6 [shape = 's32[1]{0}', space=sflag, size = 0x4, scoped, tag = 'scoped memory for tpu_custom_call.1']
    #allocation7 [shape = 'u8[32768]{0}', space=vmem, size = 0x8000, scoped, tag = 'output window, operand 0, single buffered']
    %13 = vsyncpa [#allocation5], 0
    %14 = vsyncpa [#allocation6], 0
    // Predicated region
    $region2: #{tpu_custom_call.1} parent=1 // pred_check
      _
    $region3: #{tpu_custom_call.1} parent=1 // pred_check_branch
      %16 = sbr.rel (0) target = $region5
    $region4: #{tpu_custom_call.1} parent=1 // pred_region
      _
    $region5: #{tpu_custom_call.1} parent=1 // pred_fallthru
      _
    // Predicated region
    $region6: #{tpu_custom_call.1} parent=1 // pred_check
      _
    $region7: #{tpu_custom_call.1} parent=1 // pred_check_branch
      %18 = sbr.rel (0) target = $region9
    $region8: #{tpu_custom_call.1} parent=1 // pred_region
      _
    $region9: #{tpu_custom_call.1} parent=1 // pred_fallthru
      _
    // Predicated region
    $region10: #{tpu_custom_call.1} parent=1 // pred_check
      _
    $region11: #{tpu_custom_call.1} parent=1 // pred_check_branch
      %20 = sbr.rel (0) target = $region13
    $region12: #{tpu_custom_call.1} parent=1 // pred_region
      _
    $region13: #{tpu_custom_call.1} parent=1 // pred_fallthru
      _
    // Predicated region
    $region14: #{tpu_custom_call.1} parent=1 // pred_check
      _
    $region15: #{tpu_custom_call.1} parent=1 // pred_check_branch
      %22 = sbr.rel (0) target = $region17
    $region16: #{tpu_custom_call.1} parent=1 // pred_region
      %s24 = ssub.s32 2048, 2048
      %25 = vsyncadd [#allocation5], %s24
      %s26 = sshll.u32 [#allocation4], 4
      %s27 = int_to_ptr.vmem [resolvable:$true] %s26
      %32 = dma.hbm_to_vmem [thread:$0]  %s3, 2048, %s27, [#allocation5], 256, 256, 16
    $region17: #{tpu_custom_call.1} parent=1 // pred_fallthru
      _
    // Predicated region
    $region18: #{tpu_custom_call.1} parent=1 // pred_check
      _
    $region19: #{tpu_custom_call.1} parent=1 // pred_check_branch
      %34 = sbr.rel (0) target = $region21
    $region20: #{tpu_custom_call.1} parent=1 // pred_region
      _
    $region21: #{tpu_custom_call.1} parent=1 // pred_fallthru
      _
    // Predicated region
    $region22: #{tpu_custom_call.1} parent=1 // pred_check
      _
    $region23: #{tpu_custom_call.1} parent=1 // pred_check_branch
      %36 = sbr.rel (0) target = $region25
    $region24: #{tpu_custom_call.1} parent=1 // pred_region
      _
    $region25: #{tpu_custom_call.1} parent=1 // pred_fallthru
      _
    // Predicated region
    $region26: #{tpu_custom_call.1} parent=1 // pred_check
      _
    $region27: #{tpu_custom_call.1} parent=1 // pred_check_branch
      %38 = sbr.rel (0) target = $region29
    $region28: #{tpu_custom_call.1} parent=1 // pred_region
      _
    $region29: #{tpu_custom_call.1} parent=1 // pred_fallthru
      _
    // Predicated region
    $region30: #{tpu_custom_call.1} parent=1 // pred_check
      _
    $region31: #{tpu_custom_call.1} parent=1 // pred_check_branch
      %40 = sbr.rel (0) target = $region33
    $region32: #{tpu_custom_call.1} parent=1 // pred_region
      _
    $region33: #{tpu_custom_call.1} parent=1 // pred_fallthru
      _
    // Predicated region
    $region34: #{tpu_custom_call.1} parent=1 // pred_check
      _
    $region35: #{tpu_custom_call.1} parent=1 // pred_check_branch
      %42 = sbr.rel (0) target = $region37
    $region36: #{tpu_custom_call.1} parent=1 // pred_region
      %43 = dma.done [#allocation5], 2048
    $region37: #{tpu_custom_call.1} parent=1 // pred_fallthru
      _
    %v44 = vld [vmem:[%s0] sm:$0xff]
    %v45 = vld [vmem:[%s0 + $0x8] sm:$0xff]
    %v46 = vld [vmem:[%s0 + $0x10] sm:$0xff]
    %v47 = vld [vmem:[%s0 + $0x18] sm:$0xff]
    %v48 = vld [vmem:[%s0 + $0x20] sm:$0xff]
    %v49 = vld [vmem:[%s0 + $0x28] sm:$0xff]
    %v50 = vld [vmem:[%s0 + $0x30] sm:$0xff]
    %v51 = vld [vmem:[%s0 + $0x38] sm:$0xff]
    %v52 = vld [vmem:[%s1] sm:$0xff]
    %v53 = vld [vmem:[%s1 + $0x8] sm:$0xff]
    %v54 = vld [vmem:[%s2] sm:$0x1]
    %v56 = vlaneseq
    %v57 = vshrl.u32 %v56, 7
    %v58 = vsub.s32 0, %v57
    %v59 = vrot.slane %v54, %v58
    %vm61 = vcmask 130048
    %v63 = vsel %vm61, %v44, 0
    %v66 = vsel %vm61, %v45, 0
    %v69 = vsel %vm61, %v46, 0
    %v72 = vsel %vm61, %v47, 0
    %v75 = vsel %vm61, %v48, 0
    %v78 = vsel %vm61, %v49, 0
    %v81 = vsel %vm61, %v50, 0
    %v84 = vsel %vm61, %v51, 0
    %86 = vmatprep.subr.mxu0 0.0
    %87 = vmatpush1.msra.mxu0 %v52
    %88 = vmatprep.subr.mxu0 0.0
    %89 = vmatpush1.msra.mxu0 %v53
    %90 = vmatprep.subr.mxu0 0.0
    %91 = vmatpush1.msra.mxu0 0.0
    %92 = vmatprep.subr.mxu0 0.0
    %93 = vmatpush1.msra.mxu0 0.0
    %94 = vmatprep.subr.mxu0 0.0
    %95 = vmatpush1.msra.mxu0 0.0
    %96 = vmatprep.subr.mxu0 0.0
    %97 = vmatpush1.msra.mxu0 0.0
    %98 = vmatprep.subr.mxu0 0.0
    %99 = vmatpush1.msra.mxu0 0.0
    %100 = vmatprep.subr.mxu0 0.0
    %101 = vmatpush1.msra.mxu0 0.0
    %102 = vmatprep.subr.mxu0 0.0
    %103 = vmatpush1.msra.mxu0 0.0
    %104 = vmatprep.subr.mxu0 0.0
    %105 = vmatpush1.msra.mxu0 0.0
    %106 = vmatprep.subr.mxu0 0.0
    %107 = vmatpush1.msra.mxu0 0.0
    %108 = vmatprep.subr.mxu0 0.0
    %109 = vmatpush1.msra.mxu0 0.0
    %110 = vmatprep.subr.mxu0 0.0
    %111 = vmatpush1.msra.mxu0 0.0
    %112 = vmatprep.subr.mxu0 0.0
    %113 = vmatpush1.msra.mxu0 0.0
    %114 = vmatprep.subr.mxu0 0.0
    %115 = vmatpush1.msra.mxu0 0.0
    %116 = vmatprep.subr.mxu0 0.0
    %117 = vmatpush1.msra.mxu0 0.0
    %118 = vmatprep.subr.mxu0 0.0
    %119 = vmatpush1.msra.mxu0 0.0
    %120 = vmatprep.subr.mxu0 0.0
    %121 = vmatpush1.msra.mxu0 0.0
    %122 = vmatprep.subr.mxu0 0.0
    %123 = vmatpush1.msra.mxu0 0.0
    %124 = vmatprep.subr.mxu0 0.0
    %125 = vmatpush1.msra.mxu0 0.0
    %126 = vmatprep.subr.mxu0 0.0
    %127 = vmatpush1.msra.mxu0 0.0
    %128 = vmatprep.subr.mxu0 0.0
    %129 = vmatpush1.msra.mxu0 0.0
    %130 = vmatprep.subr.mxu0 0.0
    %131 = vmatpush1.msra.mxu0 0.0
    %132 = vmatprep.subr.mxu0 0.0
    %133 = vmatpush1.msra.mxu0 0.0
    %134 = vmatprep.subr.mxu0 0.0
    %135 = vmatpush1.msra.mxu0 0.0
    %136 = vmatprep.subr.mxu0 0.0
    %137 = vmatpush1.msra.mxu0 0.0
    %138 = vmatprep.subr.mxu0 0.0
    %139 = vmatpush1.msra.mxu0 0.0
    %140 = vmatprep.subr.mxu0 0.0
    %141 = vmatpush1.msra.mxu0 0.0
    %142 = vmatprep.subr.mxu0 0.0
    %143 = vmatpush1.msra.mxu0 0.0
    %144 = vmatprep.subr.mxu0 0.0
    %145 = vmatpush1.msra.mxu0 0.0
    %146 = vmatprep.subr.mxu0 0.0
    %147 = vmatpush1.msra.mxu0 0.0
    %148 = vmatprep.subr.mxu0 0.0
    %149 = vmatpush1.msra.mxu0 0.0
    %150 = vmatprep.mubr.f32.mxu0 0.0
    %151 = vmatmul.mubr.f32.gmra.mrb[0].mxu0 %v63
    %v152 = vpop.f32.mrb[0].mxu0
    %v153 = vadd.f32 %v59, %v152
    %v154 = vpop.f32.mrb[0].mxu0
    %155 = vmatprep.mubr.f32.mxu0 0.0
    %156 = vmatmul.mubr.f32.gmra.mrb[0].mxu0 %v66
    %v157 = vpop.f32.mrb[0].mxu0
    %v158 = vadd.f32 %v59, %v157
    %v159 = vpop.f32.mrb[0].mxu0
    %160 = vmatprep.mubr.f32.mxu0 0.0
    %161 = vmatmul.mubr.f32.gmra.mrb[0].mxu0 %v69
    %v162 = vpop.f32.mrb[0].mxu0
    %v163 = vadd.f32 %v59, %v162
    %v164 = vpop.f32.mrb[0].mxu0
    %165 = vmatprep.mubr.f32.mxu0 0.0
    %166 = vmatmul.mubr.f32.gmra.mrb[0].mxu0 %v72
    %v167 = vpop.f32.mrb[0].mxu0
    %v168 = vadd.f32 %v59, %v167
    %v169 = vpop.f32.mrb[0].mxu0
    %170 = vmatprep.mubr.f32.mxu0 0.0
    %171 = vmatmul.mubr.f32.gmra.mrb[0].mxu0 %v75
    %v172 = vpop.f32.mrb[0].mxu0
    %v173 = vadd.f32 %v59, %v172
    %v174 = vpop.f32.mrb[0].mxu0
    %175 = vmatprep.mubr.f32.mxu0 0.0
    %176 = vmatmul.mubr.f32.gmra.mrb[0].mxu0 %v78
    %v177 = vpop.f32.mrb[0].mxu0
    %v178 = vadd.f32 %v59, %v177
    %v179 = vpop.f32.mrb[0].mxu0
    %180 = vmatprep.mubr.f32.mxu0 0.0
    %181 = vmatmul.mubr.f32.gmra.mrb[0].mxu0 %v81
    %v182 = vpop.f32.mrb[0].mxu0
    %v183 = vadd.f32 %v59, %v182
    %v184 = vpop.f32.mrb[0].mxu0
    %185 = vmatprep.mubr.f32.mxu0 0.0
    %186 = vmatmul.mubr.f32.gmra.mrb[0].mxu0 %v84
    %v187 = vpop.f32.mrb[0].mxu0
    %v188 = vadd.f32 %v59, %v187
    %v189 = vpop.f32.mrb[0].mxu0
    %190 = vdwg.mxu0
    %191 = vst [vmem:[#allocation2] sm:$0xff] %v153
    %192 = vst [vmem:[#allocation2 + $0x8] sm:$0xff] %v158
    %193 = vst [vmem:[#allocation2 + $0x10] sm:$0xff] %v163
    %194 = vst [vmem:[#allocation2 + $0x18] sm:$0xff] %v168
    %195 = vst [vmem:[#allocation2 + $0x20] sm:$0xff] %v173
    %196 = vst [vmem:[#allocation2 + $0x28] sm:$0xff] %v178
    %197 = vst [vmem:[#allocation2 + $0x30] sm:$0xff] %v183
    %198 = vst [vmem:[#allocation2 + $0x38] sm:$0xff] %v188
    %v199 = vld [vmem:[#allocation4] sm:$0xff]
    %v200 = vld [vmem:[#allocation4 + $0x8] sm:$0xff]
    %v201 = vld [vmem:[#allocation4 + $0x10] sm:$0xff]
    %v202 = vld [vmem:[#allocation4 + $0x18] sm:$0xff]
    %v203 = vld [vmem:[#allocation4 + $0x20] sm:$0xff]
    %v204 = vld [vmem:[#allocation4 + $0x28] sm:$0xff]
    %v205 = vld [vmem:[#allocation4 + $0x30] sm:$0xff]
    %v206 = vld [vmem:[#allocation4 + $0x38] sm:$0xff]
    %v207 = vld [vmem:[#allocation4 + $0x40] sm:$0xff]
    %v208 = vld [vmem:[#allocation4 + $0x48] sm:$0xff]
    %v209 = vld [vmem:[#allocation4 + $0x50] sm:$0xff]
    %v210 = vld [vmem:[#allocation4 + $0x58] sm:$0xff]
    %v211 = vld [vmem:[#allocation4 + $0x60] sm:$0xff]
    %v212 = vld [vmem:[#allocation4 + $0x68] sm:$0xff]
    %v213 = vld [vmem:[#allocation4 + $0x70] sm:$0xff]
    %v214 = vld [vmem:[#allocation4 + $0x78] sm:$0xff]
    %v215 = vld [vmem:[%s4] sm:$0xff]
    %v216 = vld [vmem:[%s4 + $0x8] sm:$0xff]
    %v217 = vld [vmem:[%s4 + $0x10] sm:$0xff]
    %v218 = vld [vmem:[%s4 + $0x18] sm:$0xff]
    %v219 = vld [vmem:[%s5] sm:$0x1]
    %vm220 = vcmask 523264
    %v222 = vsel %vm220, 0.0, 0
    %224 = vmatprep.subr.mxu0 %v200
    %225 = vmatpush1.msra.mxu0 %v199
    %226 = vmatprep.subr.mxu0 %v202
    %227 = vmatpush1.msra.mxu0 %v201
    %228 = vmatprep.subr.mxu0 %v204
    %229 = vmatpush1.msra.mxu0 %v203
    %230 = vmatprep.subr.mxu0 %v206
    %231 = vmatpush1.msra.mxu0 %v205
    %232 = vmatprep.subr.mxu0 %v208
    %233 = vmatpush1.msra.mxu0 %v207
    %234 = vmatprep.subr.mxu0 %v210
    %235 = vmatpush1.msra.mxu0 %v209
    %236 = vmatprep.subr.mxu0 %v212
    %237 = vmatpush1.msra.mxu0 %v211
    %238 = vmatprep.subr.mxu0 %v214
    %239 = vmatpush1.msra.mxu0 %v213
    %240 = vmatprep.subr.mxu0 0.0
    %241 = vmatpush1.msra.mxu0 0.0
    %242 = vmatprep.subr.mxu0 0.0
    %243 = vmatpush1.msra.mxu0 0.0
    %244 = vmatprep.subr.mxu0 0.0
    %245 = vmatpush1.msra.mxu0 0.0
    %246 = vmatprep.subr.mxu0 0.0
    %247 = vmatpush1.msra.mxu0 0.0
    %248 = vmatprep.subr.mxu0 0.0
    %249 = vmatpush1.msra.mxu0 0.0
    %250 = vmatprep.subr.mxu0 0.0
    %251 = vmatpush1.msra.mxu0 0.0
    %252 = vmatprep.subr.mxu0 0.0
    %253 = vmatpush1.msra.mxu0 0.0
    %254 = vmatprep.subr.mxu0 0.0
    %255 = vmatpush1.msra.mxu0 0.0
    %256 = vmatprep.subr.mxu0 0.0
    %257 = vmatpush1.msra.mxu0 0.0
    %258 = vmatprep.subr.mxu0 0.0
    %259 = vmatpush1.msra.mxu0 0.0
    %260 = vmatprep.subr.mxu0 0.0
    %261 = vmatpush1.msra.mxu0 0.0
    %262 = vmatprep.subr.mxu0 0.0
    %263 = vmatpush1.msra.mxu0 0.0
    %264 = vmatprep.subr.mxu0 0.0
    %265 = vmatpush1.msra.mxu0 0.0
    %266 = vmatprep.subr.mxu0 0.0
    %267 = vmatpush1.msra.mxu0 0.0
    %268 = vmatprep.subr.mxu0 0.0
    %269 = vmatpush1.msra.mxu0 0.0
    %270 = vmatprep.subr.mxu0 0.0
    %271 = vmatpush1.msra.mxu0 0.0
    %272 = vmatprep.subr.mxu0 0.0
    %273 = vmatpush1.msra.mxu0 0.0
    %274 = vmatprep.subr.mxu0 0.0
    %275 = vmatpush1.msra.mxu0 0.0
    %276 = vmatprep.subr.mxu0 0.0
    %277 = vmatpush1.msra.mxu0 0.0
    %278 = vmatprep.subr.mxu0 0.0
    %279 = vmatpush1.msra.mxu0 0.0
    %280 = vmatprep.subr.mxu0 0.0
    %281 = vmatpush1.msra.mxu0 0.0
    %282 = vmatprep.subr.mxu0 0.0
    %283 = vmatpush1.msra.mxu0 0.0
    %284 = vmatprep.subr.mxu0 0.0
    %285 = vmatpush1.msra.mxu0 0.0
    %286 = vmatprep.subr.mxu0 0.0
    %287 = vmatpush1.msra.mxu0 0.0
    %288 = vmatprep.mubr.f32.mxu0 0.0
    %289 = vmatmul.mubr.f32.gmra.mrb[0].mxu0 %v222
    %v290 = vpop.f32.mrb[0].mxu0
    %v291 = vadd.f32 0.0, %v290
    %v292 = vpop.f32.mrb[0].mxu0
    %v293 = vadd.f32 0.0, %v292
    %294 = vdwg.mxu0
    %v295 = vld [vmem:[#allocation2] sm:$0xff]
    %v296 = vadd.f32 %v295, %v291
    %v297 = vxor.u32 %v296, 2147483648
    %v298 = vmul.f32 %v297, 1.442695
    %v299 = vpow.pop %v298
    %v300 = vadd.f32 %v299, 1.0
    %v301 = vrcp.pop %v300
    %v302 = vmul.f32 1.0, %v301
    %v303 = vtanh.pop %v296
    %v304 = vmul.f32 %v302, 0.0
    %306 = vrot.lane.b32.xlu0 %v303, 32
    %v307 = vpop.permute.xlu0 %306
    %v309 = vmul.f32 %v302, %v307
    %311 = vrot.lane.b32.xlu0 %v309, 32
    %v312 = vpop.permute.xlu0 %311
    %v314 = vadd.f32 %v304, %v312
    %v315 = vtanh.pop %v314
    %317 = vrot.lane.b32.xlu0 %v315, 32
    %v318 = vpop.permute.xlu0 %317
    %v320 = vmul.f32 %v302, %v318
    %322 = vrot.lane.b32.xlu0 %v320, 64
    %v323 = vpop.permute.xlu0 %322
    %vm324 = vcmask 261120
    %v325 = vsel %vm324, %v323, 0
    %327 = vmatprep.subr.mxu0 0.0
    %328 = vmatpush1.msra.mxu0 %v215
    %329 = vmatprep.subr.mxu0 0.0
    %330 = vmatpush1.msra.mxu0 %v216
    %331 = vmatprep.subr.mxu0 0.0
    %332 = vmatpush1.msra.mxu0 %v217
    %333 = vmatprep.subr.mxu0 0.0
    %334 = vmatpush1.msra.mxu0 %v218
    %335 = vmatprep.subr.mxu0 0.0
    %336 = vmatpush1.msra.mxu0 0.0
    %337 = vmatprep.subr.mxu0 0.0
    %338 = vmatpush1.msra.mxu0 0.0
    %339 = vmatprep.subr.mxu0 0.0
    %340 = vmatpush1.msra.mxu0 0.0
    %341 = vmatprep.subr.mxu0 0.0
    %342 = vmatpush1.msra.mxu0 0.0
    %343 = vmatprep.subr.mxu0 0.0
    %344 = vmatpush1.msra.mxu0 0.0
    %345 = vmatprep.subr.mxu0 0.0
    %346 = vmatpush1.msra.mxu0 0.0
    %347 = vmatprep.subr.mxu0 0.0
    %348 = vmatpush1.msra.mxu0 0.0
    %349 = vmatprep.subr.mxu0 0.0
    %350 = vmatpush1.msra.mxu0 0.0
    %351 = vmatprep.subr.mxu0 0.0
    %352 = vmatpush1.msra.mxu0 0.0
    %353 = vmatprep.subr.mxu0 0.0
    %354 = vmatpush1.msra.mxu0 0.0
    %355 = vmatprep.subr.mxu0 0.0
    %356 = vmatpush1.msra.mxu0 0.0
    %357 = vmatprep.subr.mxu0 0.0
    %358 = vmatpush1.msra.mxu0 0.0
    %359 = vmatprep.subr.mxu0 0.0
    %360 = vmatpush1.msra.mxu0 0.0
    %361 = vmatprep.subr.mxu0 0.0
    %362 = vmatpush1.msra.mxu0 0.0
    %363 = vmatprep.subr.mxu0 0.0
    %364 = vmatpush1.msra.mxu0 0.0
    %365 = vmatprep.subr.mxu0 0.0
    %366 = vmatpush1.msra.mxu0 0.0
    %367 = vmatprep.subr.mxu0 0.0
    %368 = vmatpush1.msra.mxu0 0.0
    %369 = vmatprep.subr.mxu0 0.0
    %370 = vmatpush1.msra.mxu0 0.0
    %371 = vmatprep.subr.mxu0 0.0
    %372 = vmatpush1.msra.mxu0 0.0
    %373 = vmatprep.subr.mxu0 0.0
    %374 = vmatpush1.msra.mxu0 0.0
    %375 = vmatprep.subr.mxu0 0.0
    %376 = vmatpush1.msra.mxu0 0.0
    %377 = vmatprep.subr.mxu0 0.0
    %378 = vmatpush1.msra.mxu0 0.0
    %379 = vmatprep.subr.mxu0 0.0
    %380 = vmatpush1.msra.mxu0 0.0
    %381 = vmatprep.subr.mxu0 0.0
    %382 = vmatpush1.msra.mxu0 0.0
    %383 = vmatprep.subr.mxu0 0.0
    %384 = vmatpush1.msra.mxu0 0.0
    %385 = vmatprep.subr.mxu0 0.0
    %386 = vmatpush1.msra.mxu0 0.0
    %387 = vmatprep.subr.mxu0 0.0
    %388 = vmatpush1.msra.mxu0 0.0
    %389 = vmatprep.subr.mxu0 0.0
    %390 = vmatpush1.msra.mxu0 0.0
    %391 = vmatprep.mubr.f32.mxu0 0.0
    %392 = vmatmul.mubr.f32.gmra.mrb[0].mxu0 %v325
    %v393 = vpop.f32.mrb[0].mxu0
    %v394 = vadd.f32 %v293, %v393
    %v395 = vpop.f32.mrb[0].mxu0
    %396 = vdwg.mxu0
    %v398 = vlaneseq
    %v399 = vshrl.u32 %v398, 7
    %v400 = vsub.s32 0, %v399
    %v401 = vrot.slane %v219, %v400
    %v403 = vadd.f32 %v394, %v401
    %v404 = vxor.u32 %v403, 2147483648
    %v405 = vmul.f32 %v404, 1.442695
    %v406 = vpow.pop %v405
    %v407 = vadd.f32 %v406, 1.0
    %v408 = vrcp.pop %v407
    %v409 = vmul.f32 1.0, %v408
    %v410 = vtanh.pop %v403
    %v411 = vmul.f32 %v409, 0.0
    %413 = vrot.lane.b32.xlu0 %v410, 32
    %v414 = vpop.permute.xlu0 %413
    %v416 = vmul.f32 %v409, %v414
    %418 = vrot.lane.b32.xlu0 %v416, 32
    %v419 = vpop.permute.xlu0 %418
    %v421 = vadd.f32 %v411, %v419
    %v422 = vtanh.pop %v421
    %424 = vrot.lane.b32.xlu0 %v422, 32
    %v425 = vpop.permute.xlu0 %424
    %v427 = vmul.f32 %v409, %v425
    %429 = vrot.lane.b32.xlu0 %v427, 64
    %v430 = vpop.permute.xlu0 %429
    %432 = vst.msk [vmem:[#allocation3] sm:$0xff] %vm324, %v430
    %434 = vrot.lane.b32.xlu0 %v427, 96
    %v435 = vpop.permute.xlu0 %434
    %v437 = vsel %vm324, %v323, %v435
    %v439 = vsel %vm220, %v437, 0
    %441 = vmatprep.subr.mxu0 %v200
    %442 = vmatpush1.msra.mxu0 %v199
    %443 = vmatprep.subr.mxu0 %v202
    %444 = vmatpush1.msra.mxu0 %v201
    %445 = vmatprep.subr.mxu0 %v204
    %446 = vmatpush1.msra.mxu0 %v203
    %447 = vmatprep.subr.mxu0 %v206
    %448 = vmatpush1.msra.mxu0 %v205
    %449 = vmatprep.subr.mxu0 %v208
    %450 = vmatpush1.msra.mxu0 %v207
    %451 = vmatprep.subr.mxu0 %v210
    %452 = vmatpush1.msra.mxu0 %v209
    %453 = vmatprep.subr.mxu0 %v212
    %454 = vmatpush1.msra.mxu0 %v211
    %455 = vmatprep.subr.mxu0 %v214
    %456 = vmatpush1.msra.mxu0 %v213
    %457 = vmatprep.subr.mxu0 0.0
    %458 = vmatpush1.msra.mxu0 0.0
    %459 = vmatprep.subr.mxu0 0.0
    %460 = vmatpush1.msra.mxu0 0.0
    %461 = vmatprep.subr.mxu0 0.0
    %462 = vmatpush1.msra.mxu0 0.0
    %463 = vmatprep.subr.mxu0 0.0
    %464 = vmatpush1.msra.mxu0 0.0
    %465 = vmatprep.subr.mxu0 0.0
    %466 = vmatpush1.msra.mxu0 0.0
    %467 = vmatprep.subr.mxu0 0.0
    %468 = vmatpush1.msra.mxu0 0.0
    %469 = vmatprep.subr.mxu0 0.0
    %470 = vmatpush1.msra.mxu0 0.0
    %471 = vmatprep.subr.mxu0 0.0
    %472 = vmatpush1.msra.mxu0 0.0
    %473 = vmatprep.subr.mxu0 0.0
    %474 = vmatpush1.msra.mxu0 0.0
    %475 = vmatprep.subr.mxu0 0.0
    %476 = vmatpush1.msra.mxu0 0.0
    %477 = vmatprep.subr.mxu0 0.0
    %478 = vmatpush1.msra.mxu0 0.0
    %479 = vmatprep.subr.mxu0 0.0
    %480 = vmatpush1.msra.mxu0 0.0
    %481 = vmatprep.subr.mxu0 0.0
    %482 = vmatpush1.msra.mxu0 0.0
    %483 = vmatprep.subr.mxu0 0.0
    %484 = vmatpush1.msra.mxu0 0.0
    %485 = vmatprep.subr.mxu0 0.0
    %486 = vmatpush1.msra.mxu0 0.0
    %487 = vmatprep.subr.mxu0 0.0
    %488 = vmatpush1.msra.mxu0 0.0
    %489 = vmatprep.subr.mxu0 0.0
    %490 = vmatpush1.msra.mxu0 0.0
    %491 = vmatprep.subr.mxu0 0.0
    %492 = vmatpush1.msra.mxu0 0.0
    %493 = vmatprep.subr.mxu0 0.0
    %494 = vmatpush1.msra.mxu0 0.0
    %495 = vmatprep.subr.mxu0 0.0
    %496 = vmatpush1.msra.mxu0 0.0
    %497 = vmatprep.subr.mxu0 0.0
    %498 = vmatpush1.msra.mxu0 0.0
    %499 = vmatprep.subr.mxu0 0.0
    %500 = vmatpush1.msra.mxu0 0.0
    %501 = vmatprep.subr.mxu0 0.0
    %502 = vmatpush1.msra.mxu0 0.0
    %503 = vmatprep.subr.mxu0 0.0
    %504 = vmatpush1.msra.mxu0 0.0
    %505 = vmatprep.mubr.f32.mxu0 0.0
    %506 = vmatmul.mubr.f32.gmra.mrb[0].mxu0 %v439
    %v507 = vpop.f32.mrb[0].mxu0
    %v508 = vadd.f32 0.0, %v507
    %v509 = vpop.f32.mrb[0].mxu0
    %v510 = vadd.f32 0.0, %v509
    %511 = vdwg.mxu0
    %v512 = vld [vmem:[#allocation2 + $0x8] sm:$0xff]
    %v513 = vadd.f32 %v512, %v508
    %v514 = vxor.u32 %v513, 2147483648
    %v515 = vmul.f32 %v514, 1.442695
    %v516 = vpow.pop %v515
    %v517 = vadd.f32 %v516, 1.0
    %v518 = vrcp.pop %v517
    %v519 = vmul.f32 1.0, %v518
    %v520 = vtanh.pop %v513
    %v521 = vmul.f32 %v519, %v314
    %523 = vrot.lane.b32.xlu0 %v520, 32
    %v524 = vpop.permute.xlu0 %523
    %v526 = vmul.f32 %v519, %v524
    %528 = vrot.lane.b32.xlu0 %v526, 32
    %v529 = vpop.permute.xlu0 %528
    %v531 = vadd.f32 %v521, %v529
    %v532 = vtanh.pop %v531
    %534 = vrot.lane.b32.xlu0 %v532, 32
    %v535 = vpop.permute.xlu0 %534
    %v537 = vmul.f32 %v519, %v535
    %539 = vrot.lane.b32.xlu0 %v537, 64
    %v540 = vpop.permute.xlu0 %539
    %v541 = vsel %vm324, %v540, 0
    %543 = vmatprep.subr.mxu0 0.0
    %544 = vmatpush1.msra.mxu0 %v215
    %545 = vmatprep.subr.mxu0 0.0
    %546 = vmatpush1.msra.mxu0 %v216
    %547 = vmatprep.subr.mxu0 0.0
    %548 = vmatpush1.msra.mxu0 %v217
    %549 = vmatprep.subr.mxu0 0.0
    %550 = vmatpush1.msra.mxu0 %v218
    %551 = vmatprep.subr.mxu0 0.0
    %552 = vmatpush1.msra.mxu0 0.0
    %553 = vmatprep.subr.mxu0 0.0
    %554 = vmatpush1.msra.mxu0 0.0
    %555 = vmatprep.subr.mxu0 0.0
    %556 = vmatpush1.msra.mxu0 0.0
    %557 = vmatprep.subr.mxu0 0.0
    %558 = vmatpush1.msra.mxu0 0.0
    %559 = vmatprep.subr.mxu0 0.0
    %560 = vmatpush1.msra.mxu0 0.0
    %561 = vmatprep.subr.mxu0 0.0
    %562 = vmatpush1.msra.mxu0 0.0
    %563 = vmatprep.subr.mxu0 0.0
    %564 = vmatpush1.msra.mxu0 0.0
    %565 = vmatprep.subr.mxu0 0.0
    %566 = vmatpush1.msra.mxu0 0.0
    %567 = vmatprep.subr.mxu0 0.0
    %568 = vmatpush1.msra.mxu0 0.0
    %569 = vmatprep.subr.mxu0 0.0
    %570 = vmatpush1.msra.mxu0 0.0
    %571 = vmatprep.subr.mxu0 0.0
    %572 = vmatpush1.msra.mxu0 0.0
    %573 = vmatprep.subr.mxu0 0.0
    %574 = vmatpush1.msra.mxu0 0.0
    %575 = vmatprep.subr.mxu0 0.0
    %576 = vmatpush1.msra.mxu0 0.0
    %577 = vmatprep.subr.mxu0 0.0
    %578 = vmatpush1.msra.mxu0 0.0
    %579 = vmatprep.subr.mxu0 0.0
    %580 = vmatpush1.msra.mxu0 0.0
    %581 = vmatprep.subr.mxu0 0.0
    %582 = vmatpush1.msra.mxu0 0.0
    %583 = vmatprep.subr.mxu0 0.0
    %584 = vmatpush1.msra.mxu0 0.0
    %585 = vmatprep.subr.mxu0 0.0
    %586 = vmatpush1.msra.mxu0 0.0
    %587 = vmatprep.subr.mxu0 0.0
    %588 = vmatpush1.msra.mxu0 0.0
    %589 = vmatprep.subr.mxu0 0.0
    %590 = vmatpush1.msra.mxu0 0.0
    %591 = vmatprep.subr.mxu0 0.0
    %592 = vmatpush1.msra.mxu0 0.0
    %593 = vmatprep.subr.mxu0 0.0
    %594 = vmatpush1.msra.mxu0 0.0
    %595 = vmatprep.subr.mxu0 0.0
    %596 = vmatpush1.msra.mxu0 0.0
    %597 = vmatprep.subr.mxu0 0.0
    %598 = vmatpush1.msra.mxu0 0.0
    %599 = vmatprep.subr.mxu0 0.0
    %600 = vmatpush1.msra.mxu0 0.0
    %601 = vmatprep.subr.mxu0 0.0
    %602 = vmatpush1.msra.mxu0 0.0
    %603 = vmatprep.subr.mxu0 0.0
    %604 = vmatpush1.msra.mxu0 0.0
    %605 = vmatprep.subr.mxu0 0.0
    %606 = vmatpush1.msra.mxu0 0.0
    %607 = vmatprep.mubr.f32.mxu0 0.0
    %608 = vmatmul.mubr.f32.gmra.mrb[0].mxu0 %v541
    %v609 = vpop.f32.mrb[0].mxu0
    %v610 = vadd.f32 %v510, %v609
    %v611 = vpop.f32.mrb[0].mxu0
    %612 = vdwg.mxu0
    %v613 = vadd.f32 %v610, %v401
    %v614 = vxor.u32 %v613, 2147483648
    %v615 = vmul.f32 %v614, 1.442695
    %v616 = vpow.pop %v615
    %v617 = vadd.f32 %v616, 1.0
    %v618 = vrcp.pop %v617
    %v619 = vmul.f32 1.0, %v618
    %v620 = vtanh.pop %v613
    %v621 = vmul.f32 %v619, %v421
    %623 = vrot.lane.b32.xlu0 %v620, 32
    %v624 = vpop.permute.xlu0 %623
    %v626 = vmul.f32 %v619, %v624
    %628 = vrot.lane.b32.xlu0 %v626, 32
    %v629 = vpop.permute.xlu0 %628
    %v631 = vadd.f32 %v621, %v629
    %v632 = vtanh.pop %v631
    %634 = vrot.lane.b32.xlu0 %v632, 32
    %v635 = vpop.permute.xlu0 %634
    %v637 = vmul.f32 %v619, %v635
    %639 = vrot.lane.b32.xlu0 %v637, 64
    %v640 = vpop.permute.xlu0 %639
    %642 = vst.msk [vmem:[#allocation3 + $0x8] sm:$0xff] %vm324, %v640
    %644 = vrot.lane.b32.xlu0 %v637, 96
    %v645 = vpop.permute.xlu0 %644
    %v647 = vsel %vm324, %v540, %v645
    %v649 = vsel %vm220, %v647, 0
    %651 = vmatprep.subr.mxu0 %v200
    %652 = vmatpush1.msra.mxu0 %v199
    %653 = vmatprep.subr.mxu0 %v202
    %654 = vmatpush1.msra.mxu0 %v201
    %655 = vmatprep.subr.mxu0 %v204
    %656 = vmatpush1.msra.mxu0 %v203
    %657 = vmatprep.subr.mxu0 %v206
    %658 = vmatpush1.msra.mxu0 %v205
    %659 = vmatprep.subr.mxu0 %v208
    %660 = vmatpush1.msra.mxu0 %v207
    %661 = vmatprep.subr.mxu0 %v210
    %662 = vmatpush1.msra.mxu0 %v209
    %663 = vmatprep.subr.mxu0 %v212
    %664 = vmatpush1.msra.mxu0 %v211
    %665 = vmatprep.subr.mxu0 %v214
    %666 = vmatpush1.msra.mxu0 %v213
    %667 = vmatprep.subr.mxu0 0.0
    %668 = vmatpush1.msra.mxu0 0.0
    %669 = vmatprep.subr.mxu0 0.0
    %670 = vmatpush1.msra.mxu0 0.0
    %671 = vmatprep.subr.mxu0 0.0
    %672 = vmatpush1.msra.mxu0 0.0
    %673 = vmatprep.subr.mxu0 0.0
    %674 = vmatpush1.msra.mxu0 0.0
    %675 = vmatprep.subr.mxu0 0.0
    %676 = vmatpush1.msra.mxu0 0.0
    %677 = vmatprep.subr.mxu0 0.0
    %678 = vmatpush1.msra.mxu0 0.0
    %679 = vmatprep.subr.mxu0 0.0
    %680 = vmatpush1.msra.mxu0 0.0
    %681 = vmatprep.subr.mxu0 0.0
    %682 = vmatpush1.msra.mxu0 0.0
    %683 = vmatprep.subr.mxu0 0.0
    %684 = vmatpush1.msra.mxu0 0.0
    %685 = vmatprep.subr.mxu0 0.0
    %686 = vmatpush1.msra.mxu0 0.0
    %687 = vmatprep.subr.mxu0 0.0
    %688 = vmatpush1.msra.mxu0 0.0
    %689 = vmatprep.subr.mxu0 0.0
    %690 = vmatpush1.msra.mxu0 0.0
    %691 = vmatprep.subr.mxu0 0.0
    %692 = vmatpush1.msra.mxu0 0.0
    %693 = vmatprep.subr.mxu0 0.0
    %694 = vmatpush1.msra.mxu0 0.0
    %695 = vmatprep.subr.mxu0 0.0
    %696 = vmatpush1.msra.mxu0 0.0
    %697 = vmatprep.subr.mxu0 0.0
    %698 = vmatpush1.msra.mxu0 0.0
    %699 = vmatprep.subr.mxu0 0.0
    %700 = vmatpush1.msra.mxu0 0.0
    %701 = vmatprep.subr.mxu0 0.0
    %702 = vmatpush1.msra.mxu0 0.0
    %703 = vmatprep.subr.mxu0 0.0
    %704 = vmatpush1.msra.mxu0 0.0
    %705 = vmatprep.subr.mxu0 0.0
    %706 = vmatpush1.msra.mxu0 0.0
    %707 = vmatprep.subr.mxu0 0.0
    %708 = vmatpush1.msra.mxu0 0.0
    %709 = vmatprep.subr.mxu0 0.0
    %710 = vmatpush1.msra.mxu0 0.0
    %711 = vmatprep.subr.mxu0 0.0
    %712 = vmatpush1.msra.mxu0 0.0
    %713 = vmatprep.subr.mxu0 0.0
    %714 = vmatpush1.msra.mxu0 0.0
    %715 = vmatprep.mubr.f32.mxu0 0.0
    %716 = vmatmul.mubr.f32.gmra.mrb[0].mxu0 %v649
    %v717 = vpop.f32.mrb[0].mxu0
    %v718 = vadd.f32 0.0, %v717
    %v719 = vpop.f32.mrb[0].mxu0
    %v720 = vadd.f32 0.0, %v719
    %721 = vdwg.mxu0
    %v722 = vld [vmem:[#allocation2 + $0x10] sm:$0xff]
    %v723 = vadd.f32 %v722, %v718
    %v724 = vxor.u32 %v723, 2147483648
    %v725 = vmul.f32 %v724, 1.442695
    %v726 = vpow.pop %v725
    %v727 = vadd.f32 %v726, 1.0
    %v728 = vrcp.pop %v727
    %v729 = vmul.f32 1.0, %v728
    %v730 = vtanh.pop %v723
    %v731 = vmul.f32 %v729, %v531
    %733 = vrot.lane.b32.xlu0 %v730, 32
    %v734 = vpop.permute.xlu0 %733
    %v736 = vmul.f32 %v729, %v734
    %738 = vrot.lane.b32.xlu0 %v736, 32
    %v739 = vpop.permute.xlu0 %738
    %v741 = vadd.f32 %v731, %v739
    %v742 = vtanh.pop %v741
    %744 = vrot.lane.b32.xlu0 %v742, 32
    %v745 = vpop.permute.xlu0 %744
    %v747 = vmul.f32 %v729, %v745
    %749 = vrot.lane.b32.xlu0 %v747, 64
    %v750 = vpop.permute.xlu0 %749
    %v751 = vsel %vm324, %v750, 0
    %753 = vmatprep.subr.mxu0 0.0
    %754 = vmatpush1.msra.mxu0 %v215
    %755 = vmatprep.subr.mxu0 0.0
    %756 = vmatpush1.msra.mxu0 %v216
    %757 = vmatprep.subr.mxu0 0.0
    %758 = vmatpush1.msra.mxu0 %v217
    %759 = vmatprep.subr.mxu0 0.0
    %760 = vmatpush1.msra.mxu0 %v218
    %761 = vmatprep.subr.mxu0 0.0
    %762 = vmatpush1.msra.mxu0 0.0
    %763 = vmatprep.subr.mxu0 0.0
    %764 = vmatpush1.msra.mxu0 0.0
    %765 = vmatprep.subr.mxu0 0.0
    %766 = vmatpush1.msra.mxu0 0.0
    %767 = vmatprep.subr.mxu0 0.0
    %768 = vmatpush1.msra.mxu0 0.0
    %769 = vmatprep.subr.mxu0 0.0
    %770 = vmatpush1.msra.mxu0 0.0
    %771 = vmatprep.subr.mxu0 0.0
    %772 = vmatpush1.msra.mxu0 0.0
    %773 = vmatprep.subr.mxu0 0.0
    %774 = vmatpush1.msra.mxu0 0.0
    %775 = vmatprep.subr.mxu0 0.0
    %776 = vmatpush1.msra.mxu0 0.0
    %777 = vmatprep.subr.mxu0 0.0
    %778 = vmatpush1.msra.mxu0 0.0
    %779 = vmatprep.subr.mxu0 0.0
    %780 = vmatpush1.msra.mxu0 0.0
    %781 = vmatprep.subr.mxu0 0.0
    %782 = vmatpush1.msra.mxu0 0.0
    %783 = vmatprep.subr.mxu0 0.0
    %784 = vmatpush1.msra.mxu0 0.0
    %785 = vmatprep.subr.mxu0 0.0
    %786 = vmatpush1.msra.mxu0 0.0
    %787 = vmatprep.subr.mxu0 0.0
    %788 = vmatpush1.msra.mxu0 0.0
    %789 = vmatprep.subr.mxu0 0.0
    %790 = vmatpush1.msra.mxu0 0.0
    %791 = vmatprep.subr.mxu0 0.0
    %792 = vmatpush1.msra.mxu0 0.0
    %793 = vmatprep.subr.mxu0 0.0
    %794 = vmatpush1.msra.mxu0 0.0
    %795 = vmatprep.subr.mxu0 0.0
    %796 = vmatpush1.msra.mxu0 0.0
    %797 = vmatprep.subr.mxu0 0.0
    %798 = vmatpush1.msra.mxu0 0.0
    %799 = vmatprep.subr.mxu0 0.0
    %800 = vmatpush1.msra.mxu0 0.0
    %801 = vmatprep.subr.mxu0 0.0
    %802 = vmatpush1.msra.mxu0 0.0
    %803 = vmatprep.subr.mxu0 0.0
    %804 = vmatpush1.msra.mxu0 0.0
    %805 = vmatprep.subr.mxu0 0.0
    %806 = vmatpush1.msra.mxu0 0.0
    %807 = vmatprep.subr.mxu0 0.0
    %808 = vmatpush1.msra.mxu0 0.0
    %809 = vmatprep.subr.mxu0 0.0
    %810 = vmatpush1.msra.mxu0 0.0
    %811 = vmatprep.subr.mxu0 0.0
    %812 = vmatpush1.msra.mxu0 0.0
    %813 = vmatprep.subr.mxu0 0.0
    %814 = vmatpush1.msra.mxu0 0.0
    %815 = vmatprep.subr.mxu0 0.0
    %816 = vmatpush1.msra.mxu0 0.0
    %817 = vmatprep.mubr.f32.mxu0 0.0
    %818 = vmatmul.mubr.f32.gmra.mrb[0].mxu0 %v751
    %v819 = vpop.f32.mrb[0].mxu0
    %v820 = vadd.f32 %v720, %v819
    %v821 = vpop.f32.mrb[0].mxu0
    %822 = vdwg.mxu0
    %v823 = vadd.f32 %v820, %v401
    %v824 = vxor.u32 %v823, 2147483648
    %v825 = vmul.f32 %v824, 1.442695
    %v826 = vpow.pop %v825
    %v827 = vadd.f32 %v826, 1.0
    %v828 = vrcp.pop %v827
    %v829 = vmul.f32 1.0, %v828
    %v830 = vtanh.pop %v823
    %v831 = vmul.f32 %v829, %v631
    %833 = vrot.lane.b32.xlu0 %v830, 32
    %v834 = vpop.permute.xlu0 %833
    %v836 = vmul.f32 %v829, %v834
    %838 = vrot.lane.b32.xlu0 %v836, 32
    %v839 = vpop.permute.xlu0 %838
    %v841 = vadd.f32 %v831, %v839
    %v842 = vtanh.pop %v841
    %844 = vrot.lane.b32.xlu0 %v842, 32
    %v845 = vpop.permute.xlu0 %844
    %v847 = vmul.f32 %v829, %v845
    %849 = vrot.lane.b32.xlu0 %v847, 64
    %v850 = vpop.permute.xlu0 %849
    %852 = vst.msk [vmem:[#allocation3 + $0x10] sm:$0xff] %vm324, %v850
    %854 = vrot.lane.b32.xlu0 %v847, 96
    %v855 = vpop.permute.xlu0 %854
    %v857 = vsel %vm324, %v750, %v855
    %v859 = vsel %vm220, %v857, 0
    %861 = vmatprep.subr.mxu0 %v200
    %862 = vmatpush1.msra.mxu0 %v199
    %863 = vmatprep.subr.mxu0 %v202
    %864 = vmatpush1.msra.mxu0 %v201
    %865 = vmatprep.subr.mxu0 %v204
    %866 = vmatpush1.msra.mxu0 %v203
    %867 = vmatprep.subr.mxu0 %v206
    %868 = vmatpush1.msra.mxu0 %v205
    %869 = vmatprep.subr.mxu0 %v208
    %870 = vmatpush1.msra.mxu0 %v207
    %871 = vmatprep.subr.mxu0 %v210
    %872 = vmatpush1.msra.mxu0 %v209
    %873 = vmatprep.subr.mxu0 %v212
    %874 = vmatpush1.msra.mxu0 %v211
    %875 = vmatprep.subr.mxu0 %v214
    %876 = vmatpush1.msra.mxu0 %v213
    %877 = vmatprep.subr.mxu0 0.0
    %878 = vmatpush1.msra.mxu0 0.0
    %879 = vmatprep.subr.mxu0 0.0
    %880 = vmatpush1.msra.mxu0 0.0
    %881 = vmatprep.subr.mxu0 0.0
    %882 = vmatpush1.msra.mxu0 0.0
    %883 = vmatprep.subr.mxu0 0.0
    %884 = vmatpush1.msra.mxu0 0.0
    %885 = vmatprep.subr.mxu0 0.0
    %886 = vmatpush1.msra.mxu0 0.0
    %887 = vmatprep.subr.mxu0 0.0
    %888 = vmatpush1.msra.mxu0 0.0
    %889 = vmatprep.subr.mxu0 0.0
    %890 = vmatpush1.msra.mxu0 0.0
    %891 = vmatprep.subr.mxu0 0.0
    %892 = vmatpush1.msra.mxu0 0.0
    %893 = vmatprep.subr.mxu0 0.0
    %894 = vmatpush1.msra.mxu0 0.0
    %895 = vmatprep.subr.mxu0 0.0
    %896 = vmatpush1.msra.mxu0 0.0
    %897 = vmatprep.subr.mxu0 0.0
    %898 = vmatpush1.msra.mxu0 0.0
    %899 = vmatprep.subr.mxu0 0.0
    %900 = vmatpush1.msra.mxu0 0.0
    %901 = vmatprep.subr.mxu0 0.0
    %902 = vmatpush1.msra.mxu0 0.0
    %903 = vmatprep.subr.mxu0 0.0
    %904 = vmatpush1.msra.mxu0 0.0
    %905 = vmatprep.subr.mxu0 0.0
    %906 = vmatpush1.msra.mxu0 0.0
    %907 = vmatprep.subr.mxu0 0.0
    %908 = vmatpush1.msra.mxu0 0.0
    %909 = vmatprep.subr.mxu0 0.0
    %910 = vmatpush1.msra.mxu0 0.0
    %911 = vmatprep.subr.mxu0 0.0
    %912 = vmatpush1.msra.mxu0 0.0
    %913 = vmatprep.subr.mxu0 0.0
    %914 = vmatpush1.msra.mxu0 0.0
    %915 = vmatprep.subr.mxu0 0.0
    %916 = vmatpush1.msra.mxu0 0.0
    %917 = vmatprep.subr.mxu0 0.0
    %918 = vmatpush1.msra.mxu0 0.0
    %919 = vmatprep.subr.mxu0 0.0
    %920 = vmatpush1.msra.mxu0 0.0
    %921 = vmatprep.subr.mxu0 0.0
    %922 = vmatpush1.msra.mxu0 0.0
    %923 = vmatprep.subr.mxu0 0.0
    %924 = vmatpush1.msra.mxu0 0.0
    %925 = vmatprep.mubr.f32.mxu0 0.0
    %926 = vmatmul.mubr.f32.gmra.mrb[0].mxu0 %v859
    %v927 = vpop.f32.mrb[0].mxu0
    %v928 = vadd.f32 0.0, %v927
    %v929 = vpop.f32.mrb[0].mxu0
    %v930 = vadd.f32 0.0, %v929
    %931 = vdwg.mxu0
    %v932 = vld [vmem:[#allocation2 + $0x18] sm:$0xff]
    %v933 = vadd.f32 %v932, %v928
    %v934 = vxor.u32 %v933, 2147483648
    %v935 = vmul.f32 %v934, 1.442695
    %v936 = vpow.pop %v935
    %v937 = vadd.f32 %v936, 1.0
    %v938 = vrcp.pop %v937
    %v939 = vmul.f32 1.0, %v938
    %v940 = vtanh.pop %v933
    %v941 = vmul.f32 %v939, %v741
    %943 = vrot.lane.b32.xlu0 %v940, 32
    %v944 = vpop.permute.xlu0 %943
    %v946 = vmul.f32 %v939, %v944
    %948 = vrot.lane.b32.xlu0 %v946, 32
    %v949 = vpop.permute.xlu0 %948
    %v951 = vadd.f32 %v941, %v949
    %v952 = vtanh.pop %v951
    %954 = vrot.lane.b32.xlu0 %v952, 32
    %v955 = vpop.permute.xlu0 %954
    %v957 = vmul.f32 %v939, %v955
    %959 = vrot.lane.b32.xlu0 %v957, 64
    %v960 = vpop.permute.xlu0 %959
    %v961 = vsel %vm324, %v960, 0
    %963 = vmatprep.subr.mxu0 0.0
    %964 = vmatpush1.msra.mxu0 %v215
    %965 = vmatprep.subr.mxu0 0.0
    %966 = vmatpush1.msra.mxu0 %v216
    %967 = vmatprep.subr.mxu0 0.0
    %968 = vmatpush1.msra.mxu0 %v217
    %969 = vmatprep.subr.mxu0 0.0
    %970 = vmatpush1.msra.mxu0 %v218
    %971 = vmatprep.subr.mxu0 0.0
    %972 = vmatpush1.msra.mxu0 0.0
    %973 = vmatprep.subr.mxu0 0.0
    %974 = vmatpush1.msra.mxu0 0.0
    %975 = vmatprep.subr.mxu0 0.0
    %976 = vmatpush1.msra.mxu0 0.0
    %977 = vmatprep.subr.mxu0 0.0
    %978 = vmatpush1.msra.mxu0 0.0
    %979 = vmatprep.subr.mxu0 0.0
    %980 = vmatpush1.msra.mxu0 0.0
    %981 = vmatprep.subr.mxu0 0.0
    %982 = vmatpush1.msra.mxu0 0.0
    %983 = vmatprep.subr.mxu0 0.0
    %984 = vmatpush1.msra.mxu0 0.0
    %985 = vmatprep.subr.mxu0 0.0
    %986 = vmatpush1.msra.mxu0 0.0
    %987 = vmatprep.subr.mxu0 0.0
    %988 = vmatpush1.msra.mxu0 0.0
    %989 = vmatprep.subr.mxu0 0.0
    %990 = vmatpush1.msra.mxu0 0.0
    %991 = vmatprep.subr.mxu0 0.0
    %992 = vmatpush1.msra.mxu0 0.0
    %993 = vmatprep.subr.mxu0 0.0
    %994 = vmatpush1.msra.mxu0 0.0
    %995 = vmatprep.subr.mxu0 0.0
    %996 = vmatpush1.msra.mxu0 0.0
    %997 = vmatprep.subr.mxu0 0.0
    %998 = vmatpush1.msra.mxu0 0.0
    %999 = vmatprep.subr.mxu0 0.0
    %1000 = vmatpush1.msra.mxu0 0.0
    %1001 = vmatprep.subr.mxu0 0.0
    %1002 = vmatpush1.msra.mxu0 0.0
    %1003 = vmatprep.subr.mxu0 0.0
    %1004 = vmatpush1.msra.mxu0 0.0
    %1005 = vmatprep.subr.mxu0 0.0
    %1006 = vmatpush1.msra.mxu0 0.0
    %1007 = vmatprep.subr.mxu0 0.0
    %1008 = vmatpush1.msra.mxu0 0.0
    %1009 = vmatprep.subr.mxu0 0.0
    %1010 = vmatpush1.msra.mxu0 0.0
    %1011 = vmatprep.subr.mxu0 0.0
    %1012 = vmatpush1.msra.mxu0 0.0
    %1013 = vmatprep.subr.mxu0 0.0
    %1014 = vmatpush1.msra.mxu0 0.0
    %1015 = vmatprep.subr.mxu0 0.0
    %1016 = vmatpush1.msra.mxu0 0.0
    %1017 = vmatprep.subr.mxu0 0.0
    %1018 = vmatpush1.msra.mxu0 0.0
    %1019 = vmatprep.subr.mxu0 0.0
    %1020 = vmatpush1.msra.mxu0 0.0
    %1021 = vmatprep.subr.mxu0 0.0
    %1022 = vmatpush1.msra.mxu0 0.0
    %1023 = vmatprep.subr.mxu0 0.0
    %1024 = vmatpush1.msra.mxu0 0.0
    %1025 = vmatprep.subr.mxu0 0.0
    %1026 = vmatpush1.msra.mxu0 0.0
    %1027 = vmatprep.mubr.f32.mxu0 0.0
    %1028 = vmatmul.mubr.f32.gmra.mrb[0].mxu0 %v961
    %v1029 = vpop.f32.mrb[0].mxu0
    %v1030 = vadd.f32 %v930, %v1029
    %v1031 = vpop.f32.mrb[0].mxu0
    %1032 = vdwg.mxu0
    %v1033 = vadd.f32 %v1030, %v401
    %v1034 = vxor.u32 %v1033, 2147483648
    %v1035 = vmul.f32 %v1034, 1.442695
    %v1036 = vpow.pop %v1035
    %v1037 = vadd.f32 %v1036, 1.0
    %v1038 = vrcp.pop %v1037
    %v1039 = vmul.f32 1.0, %v1038
    %v1040 = vtanh.pop %v1033
    %v1041 = vmul.f32 %v1039, %v841
    %1043 = vrot.lane.b32.xlu0 %v1040, 32
    %v1044 = vpop.permute.xlu0 %1043
    %v1046 = vmul.f32 %v1039, %v1044
    %1048 = vrot.lane.b32.xlu0 %v1046, 32
    %v1049 = vpop.permute.xlu0 %1048
    %v1051 = vadd.f32 %v1041, %v1049
    %v1052 = vtanh.pop %v1051
    %1054 = vrot.lane.b32.xlu0 %v1052, 32
    %v1055 = vpop.permute.xlu0 %1054
    %v1057 = vmul.f32 %v1039, %v1055
    %1059 = vrot.lane.b32.xlu0 %v1057, 64
    %v1060 = vpop.permute.xlu0 %1059
    %1062 = vst.msk [vmem:[#allocation3 + $0x18] sm:$0xff] %vm324, %v1060
    %1064 = vrot.lane.b32.xlu0 %v1057, 96
    %v1065 = vpop.permute.xlu0 %1064
    %v1067 = vsel %vm324, %v960, %v1065
    %v1069 = vsel %vm220, %v1067, 0
    %1071 = vmatprep.subr.mxu0 %v200
    %1072 = vmatpush1.msra.mxu0 %v199
    %1073 = vmatprep.subr.mxu0 %v202
    %1074 = vmatpush1.msra.mxu0 %v201
    %1075 = vmatprep.subr.mxu0 %v204
    %1076 = vmatpush1.msra.mxu0 %v203
    %1077 = vmatprep.subr.mxu0 %v206
    %1078 = vmatpush1.msra.mxu0 %v205
    %1079 = vmatprep.subr.mxu0 %v208
    %1080 = vmatpush1.msra.mxu0 %v207
    %1081 = vmatprep.subr.mxu0 %v210
    %1082 = vmatpush1.msra.mxu0 %v209
    %1083 = vmatprep.subr.mxu0 %v212
    %1084 = vmatpush1.msra.mxu0 %v211
    %1085 = vmatprep.subr.mxu0 %v214
    %1086 = vmatpush1.msra.mxu0 %v213
    %1087 = vmatprep.subr.mxu0 0.0
    %1088 = vmatpush1.msra.mxu0 0.0
    %1089 = vmatprep.subr.mxu0 0.0
    %1090 = vmatpush1.msra.mxu0 0.0
    %1091 = vmatprep.subr.mxu0 0.0
    %1092 = vmatpush1.msra.mxu0 0.0
    %1093 = vmatprep.subr.mxu0 0.0
    %1094 = vmatpush1.msra.mxu0 0.0
    %1095 = vmatprep.subr.mxu0 0.0
    %1096 = vmatpush1.msra.mxu0 0.0
    %1097 = vmatprep.subr.mxu0 0.0
    %1098 = vmatpush1.msra.mxu0 0.0
    %1099 = vmatprep.subr.mxu0 0.0
    %1100 = vmatpush1.msra.mxu0 0.0
    %1101 = vmatprep.subr.mxu0 0.0
    %1102 = vmatpush1.msra.mxu0 0.0
    %1103 = vmatprep.subr.mxu0 0.0
    %1104 = vmatpush1.msra.mxu0 0.0
    %1105 = vmatprep.subr.mxu0 0.0
    %1106 = vmatpush1.msra.mxu0 0.0
    %1107 = vmatprep.subr.mxu0 0.0
    %1108 = vmatpush1.msra.mxu0 0.0
    %1109 = vmatprep.subr.mxu0 0.0
    %1110 = vmatpush1.msra.mxu0 0.0
    %1111 = vmatprep.subr.mxu0 0.0
    %1112 = vmatpush1.msra.mxu0 0.0
    %1113 = vmatprep.subr.mxu0 0.0
    %1114 = vmatpush1.msra.mxu0 0.0
    %1115 = vmatprep.subr.mxu0 0.0
    %1116 = vmatpush1.msra.mxu0 0.0
    %1117 = vmatprep.subr.mxu0 0.0
    %1118 = vmatpush1.msra.mxu0 0.0
    %1119 = vmatprep.subr.mxu0 0.0
    %1120 = vmatpush1.msra.mxu0 0.0
    %1121 = vmatprep.subr.mxu0 0.0
    %1122 = vmatpush1.msra.mxu0 0.0
    %1123 = vmatprep.subr.mxu0 0.0
    %1124 = vmatpush1.msra.mxu0 0.0
    %1125 = vmatprep.subr.mxu0 0.0
    %1126 = vmatpush1.msra.mxu0 0.0
    %1127 = vmatprep.subr.mxu0 0.0
    %1128 = vmatpush1.msra.mxu0 0.0
    %1129 = vmatprep.subr.mxu0 0.0
    %1130 = vmatpush1.msra.mxu0 0.0
    %1131 = vmatprep.subr.mxu0 0.0
    %1132 = vmatpush1.msra.mxu0 0.0
    %1133 = vmatprep.subr.mxu0 0.0
    %1134 = vmatpush1.msra.mxu0 0.0
    %1135 = vmatprep.mubr.f32.mxu0 0.0
    %1136 = vmatmul.mubr.f32.gmra.mrb[0].mxu0 %v1069
    %v1137 = vpop.f32.mrb[0].mxu0
    %v1138 = vadd.f32 0.0, %v1137
    %v1139 = vpop.f32.mrb[0].mxu0
    %v1140 = vadd.f32 0.0, %v1139
    %1141 = vdwg.mxu0
    %v1142 = vld [vmem:[#allocation2 + $0x20] sm:$0xff]
    %v1143 = vadd.f32 %v1142, %v1138
    %v1144 = vxor.u32 %v1143, 2147483648
    %v1145 = vmul.f32 %v1144, 1.442695
    %v1146 = vpow.pop %v1145
    %v1147 = vadd.f32 %v1146, 1.0
    %v1148 = vrcp.pop %v1147
    %v1149 = vmul.f32 1.0, %v1148
    %v1150 = vtanh.pop %v1143
    %v1151 = vmul.f32 %v1149, %v951
    %1153 = vrot.lane.b32.xlu0 %v1150, 32
    %v1154 = vpop.permute.xlu0 %1153
    %v1156 = vmul.f32 %v1149, %v1154
    %1158 = vrot.lane.b32.xlu0 %v1156, 32
    %v1159 = vpop.permute.xlu0 %1158
    %v1161 = vadd.f32 %v1151, %v1159
    %v1162 = vtanh.pop %v1161
    %1164 = vrot.lane.b32.xlu0 %v1162, 32
    %v1165 = vpop.permute.xlu0 %1164
    %v1167 = vmul.f32 %v1149, %v1165
    %1169 = vrot.lane.b32.xlu0 %v1167, 64
    %v1170 = vpop.permute.xlu0 %1169
    %v1171 = vsel %vm324, %v1170, 0
    %1173 = vmatprep.subr.mxu0 0.0
    %1174 = vmatpush1.msra.mxu0 %v215
    %1175 = vmatprep.subr.mxu0 0.0
    %1176 = vmatpush1.msra.mxu0 %v216
    %1177 = vmatprep.subr.mxu0 0.0
    %1178 = vmatpush1.msra.mxu0 %v217
    %1179 = vmatprep.subr.mxu0 0.0
    %1180 = vmatpush1.msra.mxu0 %v218
    %1181 = vmatprep.subr.mxu0 0.0
    %1182 = vmatpush1.msra.mxu0 0.0
    %1183 = vmatprep.subr.mxu0 0.0
    %1184 = vmatpush1.msra.mxu0 0.0
    %1185 = vmatprep.subr.mxu0 0.0
    %1186 = vmatpush1.msra.mxu0 0.0
    %1187 = vmatprep.subr.mxu0 0.0
    %1188 = vmatpush1.msra.mxu0 0.0
    %1189 = vmatprep.subr.mxu0 0.0
    %1190 = vmatpush1.msra.mxu0 0.0
    %1191 = vmatprep.subr.mxu0 0.0
    %1192 = vmatpush1.msra.mxu0 0.0
    %1193 = vmatprep.subr.mxu0 0.0
    %1194 = vmatpush1.msra.mxu0 0.0
    %1195 = vmatprep.subr.mxu0 0.0
    %1196 = vmatpush1.msra.mxu0 0.0
    %1197 = vmatprep.subr.mxu0 0.0
    %1198 = vmatpush1.msra.mxu0 0.0
    %1199 = vmatprep.subr.mxu0 0.0
    %1200 = vmatpush1.msra.mxu0 0.0
    %1201 = vmatprep.subr.mxu0 0.0
    %1202 = vmatpush1.msra.mxu0 0.0
    %1203 = vmatprep.subr.mxu0 0.0
    %1204 = vmatpush1.msra.mxu0 0.0
    %1205 = vmatprep.subr.mxu0 0.0
    %1206 = vmatpush1.msra.mxu0 0.0
    %1207 = vmatprep.subr.mxu0 0.0
    %1208 = vmatpush1.msra.mxu0 0.0
    %1209 = vmatprep.subr.mxu0 0.0
    %1210 = vmatpush1.msra.mxu0 0.0
    %1211 = vmatprep.subr.mxu0 0.0
    %1212 = vmatpush1.msra.mxu0 0.0
    %1213 = vmatprep.subr.mxu0 0.0
    %1214 = vmatpush1.msra.mxu0 0.0
    %1215 = vmatprep.subr.mxu0 0.0
    %1216 = vmatpush1.msra.mxu0 0.0
    %1217 = vmatprep.subr.mxu0 0.0
    %1218 = vmatpush1.msra.mxu0 0.0
    %1219 = vmatprep.subr.mxu0 0.0
    %1220 = vmatpush1.msra.mxu0 0.0
    %1221 = vmatprep.subr.mxu0 0.0
    %1222 = vmatpush1.msra.mxu0 0.0
    %1223 = vmatprep.subr.mxu0 0.0
    %1224 = vmatpush1.msra.mxu0 0.0
    %1225 = vmatprep.subr.mxu0 0.0
    %1226 = vmatpush1.msra.mxu0 0.0
    %1227 = vmatprep.subr.mxu0 0.0
    %1228 = vmatpush1.msra.mxu0 0.0
    %1229 = vmatprep.subr.mxu0 0.0
    %1230 = vmatpush1.msra.mxu0 0.0
    %1231 = vmatprep.subr.mxu0 0.0
    %1232 = vmatpush1.msra.mxu0 0.0
    %1233 = vmatprep.subr.mxu0 0.0
    %1234 = vmatpush1.msra.mxu0 0.0
    %1235 = vmatprep.subr.mxu0 0.0
    %1236 = vmatpush1.msra.mxu0 0.0
    %1237 = vmatprep.mubr.f32.mxu0 0.0
    %1238 = vmatmul.mubr.f32.gmra.mrb[0].mxu0 %v1171
    %v1239 = vpop.f32.mrb[0].mxu0
    %v1240 = vadd.f32 %v1140, %v1239
    %v1241 = vpop.f32.mrb[0].mxu0
    %1242 = vdwg.mxu0
    %v1243 = vadd.f32 %v1240, %v401
    %v1244 = vxor.u32 %v1243, 2147483648
    %v1245 = vmul.f32 %v1244, 1.442695
    %v1246 = vpow.pop %v1245
    %v1247 = vadd.f32 %v1246, 1.0
    %v1248 = vrcp.pop %v1247
    %v1249 = vmul.f32 1.0, %v1248
    %v1250 = vtanh.pop %v1243
    %v1251 = vmul.f32 %v1249, %v1051
    %1253 = vrot.lane.b32.xlu0 %v1250, 32
    %v1254 = vpop.permute.xlu0 %1253
    %v1256 = vmul.f32 %v1249, %v1254
    %1258 = vrot.lane.b32.xlu0 %v1256, 32
    %v1259 = vpop.permute.xlu0 %1258
    %v1261 = vadd.f32 %v1251, %v1259
    %v1262 = vtanh.pop %v1261
    %1264 = vrot.lane.b32.xlu0 %v1262, 32
    %v1265 = vpop.permute.xlu0 %1264
    %v1267 = vmul.f32 %v1249, %v1265
    %1269 = vrot.lane.b32.xlu0 %v1267, 64
    %v1270 = vpop.permute.xlu0 %1269
    %1272 = vst.msk [vmem:[#allocation3 + $0x20] sm:$0xff] %vm324, %v1270
    %1274 = vrot.lane.b32.xlu0 %v1267, 96
    %v1275 = vpop.permute.xlu0 %1274
    %v1277 = vsel %vm324, %v1170, %v1275
    %v1279 = vsel %vm220, %v1277, 0
    %1281 = vmatprep.subr.mxu0 %v200
    %1282 = vmatpush1.msra.mxu0 %v199
    %1283 = vmatprep.subr.mxu0 %v202
    %1284 = vmatpush1.msra.mxu0 %v201
    %1285 = vmatprep.subr.mxu0 %v204
    %1286 = vmatpush1.msra.mxu0 %v203
    %1287 = vmatprep.subr.mxu0 %v206
    %1288 = vmatpush1.msra.mxu0 %v205
    %1289 = vmatprep.subr.mxu0 %v208
    %1290 = vmatpush1.msra.mxu0 %v207
    %1291 = vmatprep.subr.mxu0 %v210
    %1292 = vmatpush1.msra.mxu0 %v209
    %1293 = vmatprep.subr.mxu0 %v212
    %1294 = vmatpush1.msra.mxu0 %v211
    %1295 = vmatprep.subr.mxu0 %v214
    %1296 = vmatpush1.msra.mxu0 %v213
    %1297 = vmatprep.subr.mxu0 0.0
    %1298 = vmatpush1.msra.mxu0 0.0
    %1299 = vmatprep.subr.mxu0 0.0
    %1300 = vmatpush1.msra.mxu0 0.0
    %1301 = vmatprep.subr.mxu0 0.0
    %1302 = vmatpush1.msra.mxu0 0.0
    %1303 = vmatprep.subr.mxu0 0.0
    %1304 = vmatpush1.msra.mxu0 0.0
    %1305 = vmatprep.subr.mxu0 0.0
    %1306 = vmatpush1.msra.mxu0 0.0
    %1307 = vmatprep.subr.mxu0 0.0
    %1308 = vmatpush1.msra.mxu0 0.0
    %1309 = vmatprep.subr.mxu0 0.0
    %1310 = vmatpush1.msra.mxu0 0.0
    %1311 = vmatprep.subr.mxu0 0.0
    %1312 = vmatpush1.msra.mxu0 0.0
    %1313 = vmatprep.subr.mxu0 0.0
    %1314 = vmatpush1.msra.mxu0 0.0
    %1315 = vmatprep.subr.mxu0 0.0
    %1316 = vmatpush1.msra.mxu0 0.0
    %1317 = vmatprep.subr.mxu0 0.0
    %1318 = vmatpush1.msra.mxu0 0.0
    %1319 = vmatprep.subr.mxu0 0.0
    %1320 = vmatpush1.msra.mxu0 0.0
    %1321 = vmatprep.subr.mxu0 0.0
    %1322 = vmatpush1.msra.mxu0 0.0
    %1323 = vmatprep.subr.mxu0 0.0
    %1324 = vmatpush1.msra.mxu0 0.0
    %1325 = vmatprep.subr.mxu0 0.0
    %1326 = vmatpush1.msra.mxu0 0.0
    %1327 = vmatprep.subr.mxu0 0.0
    %1328 = vmatpush1.msra.mxu0 0.0
    %1329 = vmatprep.subr.mxu0 0.0
    %1330 = vmatpush1.msra.mxu0 0.0
    %1331 = vmatprep.subr.mxu0 0.0
    %1332 = vmatpush1.msra.mxu0 0.0
    %1333 = vmatprep.subr.mxu0 0.0
    %1334 = vmatpush1.msra.mxu0 0.0
    %1335 = vmatprep.subr.mxu0 0.0
    %1336 = vmatpush1.msra.mxu0 0.0
    %1337 = vmatprep.subr.mxu0 0.0
    %1338 = vmatpush1.msra.mxu0 0.0
    %1339 = vmatprep.subr.mxu0 0.0
    %1340 = vmatpush1.msra.mxu0 0.0
    %1341 = vmatprep.subr.mxu0 0.0
    %1342 = vmatpush1.msra.mxu0 0.0
    %1343 = vmatprep.subr.mxu0 0.0
    %1344 = vmatpush1.msra.mxu0 0.0
    %1345 = vmatprep.mubr.f32.mxu0 0.0
    %1346 = vmatmul.mubr.f32.gmra.mrb[0].mxu0 %v1279
    %v1347 = vpop.f32.mrb[0].mxu0
    %v1348 = vadd.f32 0.0, %v1347
    %v1349 = vpop.f32.mrb[0].mxu0
    %v1350 = vadd.f32 0.0, %v1349
    %1351 = vdwg.mxu0
    %v1352 = vld [vmem:[#allocation2 + $0x28] sm:$0xff]
    %v1353 = vadd.f32 %v1352, %v1348
    %v1354 = vxor.u32 %v1353, 2147483648
    %v1355 = vmul.f32 %v1354, 1.442695
    %v1356 = vpow.pop %v1355
    %v1357 = vadd.f32 %v1356, 1.0
    %v1358 = vrcp.pop %v1357
    %v1359 = vmul.f32 1.0, %v1358
    %v1360 = vtanh.pop %v1353
    %v1361 = vmul.f32 %v1359, %v1161
    %1363 = vrot.lane.b32.xlu0 %v1360, 32
    %v1364 = vpop.permute.xlu0 %1363
    %v1366 = vmul.f32 %v1359, %v1364
    %1368 = vrot.lane.b32.xlu0 %v1366, 32
    %v1369 = vpop.permute.xlu0 %1368
    %v1371 = vadd.f32 %v1361, %v1369
    %v1372 = vtanh.pop %v1371
    %1374 = vrot.lane.b32.xlu0 %v1372, 32
    %v1375 = vpop.permute.xlu0 %1374
    %v1377 = vmul.f32 %v1359, %v1375
    %1379 = vrot.lane.b32.xlu0 %v1377, 64
    %v1380 = vpop.permute.xlu0 %1379
    %v1381 = vsel %vm324, %v1380, 0
    %1383 = vmatprep.subr.mxu0 0.0
    %1384 = vmatpush1.msra.mxu0 %v215
    %1385 = vmatprep.subr.mxu0 0.0
    %1386 = vmatpush1.msra.mxu0 %v216
    %1387 = vmatprep.subr.mxu0 0.0
    %1388 = vmatpush1.msra.mxu0 %v217
    %1389 = vmatprep.subr.mxu0 0.0
    %1390 = vmatpush1.msra.mxu0 %v218
    %1391 = vmatprep.subr.mxu0 0.0
    %1392 = vmatpush1.msra.mxu0 0.0
    %1393 = vmatprep.subr.mxu0 0.0
    %1394 = vmatpush1.msra.mxu0 0.0
    %1395 = vmatprep.subr.mxu0 0.0
    %1396 = vmatpush1.msra.mxu0 0.0
    %1397 = vmatprep.subr.mxu0 0.0
    %1398 = vmatpush1.msra.mxu0 0.0
    %1399 = vmatprep.subr.mxu0 0.0
    %1400 = vmatpush1.msra.mxu0 0.0
    %1401 = vmatprep.subr.mxu0 0.0
    %1402 = vmatpush1.msra.mxu0 0.0
    %1403 = vmatprep.subr.mxu0 0.0
    %1404 = vmatpush1.msra.mxu0 0.0
    %1405 = vmatprep.subr.mxu0 0.0
    %1406 = vmatpush1.msra.mxu0 0.0
    %1407 = vmatprep.subr.mxu0 0.0
    %1408 = vmatpush1.msra.mxu0 0.0
    %1409 = vmatprep.subr.mxu0 0.0
    %1410 = vmatpush1.msra.mxu0 0.0
    %1411 = vmatprep.subr.mxu0 0.0
    %1412 = vmatpush1.msra.mxu0 0.0
    %1413 = vmatprep.subr.mxu0 0.0
    %1414 = vmatpush1.msra.mxu0 0.0
    %1415 = vmatprep.subr.mxu0 0.0
    %1416 = vmatpush1.msra.mxu0 0.0
    %1417 = vmatprep.subr.mxu0 0.0
    %1418 = vmatpush1.msra.mxu0 0.0
    %1419 = vmatprep.subr.mxu0 0.0
    %1420 = vmatpush1.msra.mxu0 0.0
    %1421 = vmatprep.subr.mxu0 0.0
    %1422 = vmatpush1.msra.mxu0 0.0
    %1423 = vmatprep.subr.mxu0 0.0
    %1424 = vmatpush1.msra.mxu0 0.0
    %1425 = vmatprep.subr.mxu0 0.0
    %1426 = vmatpush1.msra.mxu0 0.0
    %1427 = vmatprep.subr.mxu0 0.0
    %1428 = vmatpush1.msra.mxu0 0.0
    %1429 = vmatprep.subr.mxu0 0.0
    %1430 = vmatpush1.msra.mxu0 0.0
    %1431 = vmatprep.subr.mxu0 0.0
    %1432 = vmatpush1.msra.mxu0 0.0
    %1433 = vmatprep.subr.mxu0 0.0
    %1434 = vmatpush1.msra.mxu0 0.0
    %1435 = vmatprep.subr.mxu0 0.0
    %1436 = vmatpush1.msra.mxu0 0.0
    %1437 = vmatprep.subr.mxu0 0.0
    %1438 = vmatpush1.msra.mxu0 0.0
    %1439 = vmatprep.subr.mxu0 0.0
    %1440 = vmatpush1.msra.mxu0 0.0
    %1441 = vmatprep.subr.mxu0 0.0
    %1442 = vmatpush1.msra.mxu0 0.0
    %1443 = vmatprep.subr.mxu0 0.0
    %1444 = vmatpush1.msra.mxu0 0.0
    %1445 = vmatprep.subr.mxu0 0.0
    %1446 = vmatpush1.msra.mxu0 0.0
    %1447 = vmatprep.mubr.f32.mxu0 0.0
    %1448 = vmatmul.mubr.f32.gmra.mrb[0].mxu0 %v1381
    %v1449 = vpop.f32.mrb[0].mxu0
    %v1450 = vadd.f32 %v1350, %v1449
    %v1451 = vpop.f32.mrb[0].mxu0
    %1452 = vdwg.mxu0
    %v1453 = vadd.f32 %v1450, %v401
    %v1454 = vxor.u32 %v1453, 2147483648
    %v1455 = vmul.f32 %v1454, 1.442695
    %v1456 = vpow.pop %v1455
    %v1457 = vadd.f32 %v1456, 1.0
    %v1458 = vrcp.pop %v1457
    %v1459 = vmul.f32 1.0, %v1458
    %v1460 = vtanh.pop %v1453
    %v1461 = vmul.f32 %v1459, %v1261
    %1463 = vrot.lane.b32.xlu0 %v1460, 32
    %v1464 = vpop.permute.xlu0 %1463
    %v1466 = vmul.f32 %v1459, %v1464
    %1468 = vrot.lane.b32.xlu0 %v1466, 32
    %v1469 = vpop.permute.xlu0 %1468
    %v1471 = vadd.f32 %v1461, %v1469
    %v1472 = vtanh.pop %v1471
    %1474 = vrot.lane.b32.xlu0 %v1472, 32
    %v1475 = vpop.permute.xlu0 %1474
    %v1477 = vmul.f32 %v1459, %v1475
    %1479 = vrot.lane.b32.xlu0 %v1477, 64
    %v1480 = vpop.permute.xlu0 %1479
    %1482 = vst.msk [vmem:[#allocation3 + $0x28] sm:$0xff] %vm324, %v1480
    %1484 = vrot.lane.b32.xlu0 %v1477, 96
    %v1485 = vpop.permute.xlu0 %1484
    %v1487 = vsel %vm324, %v1380, %v1485
    %v1489 = vsel %vm220, %v1487, 0
    %1491 = vmatprep.subr.mxu0 %v200
    %1492 = vmatpush1.msra.mxu0 %v199
    %1493 = vmatprep.subr.mxu0 %v202
    %1494 = vmatpush1.msra.mxu0 %v201
    %1495 = vmatprep.subr.mxu0 %v204
    %1496 = vmatpush1.msra.mxu0 %v203
    %1497 = vmatprep.subr.mxu0 %v206
    %1498 = vmatpush1.msra.mxu0 %v205
    %1499 = vmatprep.subr.mxu0 %v208
    %1500 = vmatpush1.msra.mxu0 %v207
    %1501 = vmatprep.subr.mxu0 %v210
    %1502 = vmatpush1.msra.mxu0 %v209
    %1503 = vmatprep.subr.mxu0 %v212
    %1504 = vmatpush1.msra.mxu0 %v211
    %1505 = vmatprep.subr.mxu0 %v214
    %1506 = vmatpush1.msra.mxu0 %v213
    %1507 = vmatprep.subr.mxu0 0.0
    %1508 = vmatpush1.msra.mxu0 0.0
    %1509 = vmatprep.subr.mxu0 0.0
    %1510 = vmatpush1.msra.mxu0 0.0
    %1511 = vmatprep.subr.mxu0 0.0
    %1512 = vmatpush1.msra.mxu0 0.0
    %1513 = vmatprep.subr.mxu0 0.0
    %1514 = vmatpush1.msra.mxu0 0.0
    %1515 = vmatprep.subr.mxu0 0.0
    %1516 = vmatpush1.msra.mxu0 0.0
    %1517 = vmatprep.subr.mxu0 0.0
    %1518 = vmatpush1.msra.mxu0 0.0
    %1519 = vmatprep.subr.mxu0 0.0
    %1520 = vmatpush1.msra.mxu0 0.0
    %1521 = vmatprep.subr.mxu0 0.0
    %1522 = vmatpush1.msra.mxu0 0.0
    %1523 = vmatprep.subr.mxu0 0.0
    %1524 = vmatpush1.msra.mxu0 0.0
    %1525 = vmatprep.subr.mxu0 0.0
    %1526 = vmatpush1.msra.mxu0 0.0
    %1527 = vmatprep.subr.mxu0 0.0
    %1528 = vmatpush1.msra.mxu0 0.0
    %1529 = vmatprep.subr.mxu0 0.0
    %1530 = vmatpush1.msra.mxu0 0.0
    %1531 = vmatprep.subr.mxu0 0.0
    %1532 = vmatpush1.msra.mxu0 0.0
    %1533 = vmatprep.subr.mxu0 0.0
    %1534 = vmatpush1.msra.mxu0 0.0
    %1535 = vmatprep.subr.mxu0 0.0
    %1536 = vmatpush1.msra.mxu0 0.0
    %1537 = vmatprep.subr.mxu0 0.0
    %1538 = vmatpush1.msra.mxu0 0.0
    %1539 = vmatprep.subr.mxu0 0.0
    %1540 = vmatpush1.msra.mxu0 0.0
    %1541 = vmatprep.subr.mxu0 0.0
    %1542 = vmatpush1.msra.mxu0 0.0
    %1543 = vmatprep.subr.mxu0 0.0
    %1544 = vmatpush1.msra.mxu0 0.0
    %1545 = vmatprep.subr.mxu0 0.0
    %1546 = vmatpush1.msra.mxu0 0.0
    %1547 = vmatprep.subr.mxu0 0.0
    %1548 = vmatpush1.msra.mxu0 0.0
    %1549 = vmatprep.subr.mxu0 0.0
    %1550 = vmatpush1.msra.mxu0 0.0
    %1551 = vmatprep.subr.mxu0 0.0
    %1552 = vmatpush1.msra.mxu0 0.0
    %1553 = vmatprep.subr.mxu0 0.0
    %1554 = vmatpush1.msra.mxu0 0.0
    %1555 = vmatprep.mubr.f32.mxu0 0.0
    %1556 = vmatmul.mubr.f32.gmra.mrb[0].mxu0 %v1489
    %v1557 = vpop.f32.mrb[0].mxu0
    %v1558 = vadd.f32 0.0, %v1557
    %v1559 = vpop.f32.mrb[0].mxu0
    %v1560 = vadd.f32 0.0, %v1559
    %1561 = vdwg.mxu0
    %v1562 = vld [vmem:[#allocation2 + $0x30] sm:$0xff]
    %v1563 = vadd.f32 %v1562, %v1558
    %v1564 = vxor.u32 %v1563, 2147483648
    %v1565 = vmul.f32 %v1564, 1.442695
    %v1566 = vpow.pop %v1565
    %v1567 = vadd.f32 %v1566, 1.0
    %v1568 = vrcp.pop %v1567
    %v1569 = vmul.f32 1.0, %v1568
    %v1570 = vtanh.pop %v1563
    %v1571 = vmul.f32 %v1569, %v1371
    %1573 = vrot.lane.b32.xlu0 %v1570, 32
    %v1574 = vpop.permute.xlu0 %1573
    %v1576 = vmul.f32 %v1569, %v1574
    %1578 = vrot.lane.b32.xlu0 %v1576, 32
    %v1579 = vpop.permute.xlu0 %1578
    %v1581 = vadd.f32 %v1571, %v1579
    %v1582 = vtanh.pop %v1581
    %1584 = vrot.lane.b32.xlu0 %v1582, 32
    %v1585 = vpop.permute.xlu0 %1584
    %v1587 = vmul.f32 %v1569, %v1585
    %1589 = vrot.lane.b32.xlu0 %v1587, 64
    %v1590 = vpop.permute.xlu0 %1589
    %v1591 = vsel %vm324, %v1590, 0
    %1593 = vmatprep.subr.mxu0 0.0
    %1594 = vmatpush1.msra.mxu0 %v215
    %1595 = vmatprep.subr.mxu0 0.0
    %1596 = vmatpush1.msra.mxu0 %v216
    %1597 = vmatprep.subr.mxu0 0.0
    %1598 = vmatpush1.msra.mxu0 %v217
    %1599 = vmatprep.subr.mxu0 0.0
    %1600 = vmatpush1.msra.mxu0 %v218
    %1601 = vmatprep.subr.mxu0 0.0
    %1602 = vmatpush1.msra.mxu0 0.0
    %1603 = vmatprep.subr.mxu0 0.0
    %1604 = vmatpush1.msra.mxu0 0.0
    %1605 = vmatprep.subr.mxu0 0.0
    %1606 = vmatpush1.msra.mxu0 0.0
    %1607 = vmatprep.subr.mxu0 0.0
    %1608 = vmatpush1.msra.mxu0 0.0
    %1609 = vmatprep.subr.mxu0 0.0
    %1610 = vmatpush1.msra.mxu0 0.0
    %1611 = vmatprep.subr.mxu0 0.0
    %1612 = vmatpush1.msra.mxu0 0.0
    %1613 = vmatprep.subr.mxu0 0.0
    %1614 = vmatpush1.msra.mxu0 0.0
    %1615 = vmatprep.subr.mxu0 0.0
    %1616 = vmatpush1.msra.mxu0 0.0
    %1617 = vmatprep.subr.mxu0 0.0
    %1618 = vmatpush1.msra.mxu0 0.0
    %1619 = vmatprep.subr.mxu0 0.0
    %1620 = vmatpush1.msra.mxu0 0.0
    %1621 = vmatprep.subr.mxu0 0.0
    %1622 = vmatpush1.msra.mxu0 0.0
    %1623 = vmatprep.subr.mxu0 0.0
    %1624 = vmatpush1.msra.mxu0 0.0
    %1625 = vmatprep.subr.mxu0 0.0
    %1626 = vmatpush1.msra.mxu0 0.0
    %1627 = vmatprep.subr.mxu0 0.0
    %1628 = vmatpush1.msra.mxu0 0.0
    %1629 = vmatprep.subr.mxu0 0.0
    %1630 = vmatpush1.msra.mxu0 0.0
    %1631 = vmatprep.subr.mxu0 0.0
    %1632 = vmatpush1.msra.mxu0 0.0
    %1633 = vmatprep.subr.mxu0 0.0
    %1634 = vmatpush1.msra.mxu0 0.0
    %1635 = vmatprep.subr.mxu0 0.0
    %1636 = vmatpush1.msra.mxu0 0.0
    %1637 = vmatprep.subr.mxu0 0.0
    %1638 = vmatpush1.msra.mxu0 0.0
    %1639 = vmatprep.subr.mxu0 0.0
    %1640 = vmatpush1.msra.mxu0 0.0
    %1641 = vmatprep.subr.mxu0 0.0
    %1642 = vmatpush1.msra.mxu0 0.0
    %1643 = vmatprep.subr.mxu0 0.0
    %1644 = vmatpush1.msra.mxu0 0.0
    %1645 = vmatprep.subr.mxu0 0.0
    %1646 = vmatpush1.msra.mxu0 0.0
    %1647 = vmatprep.subr.mxu0 0.0
    %1648 = vmatpush1.msra.mxu0 0.0
    %1649 = vmatprep.subr.mxu0 0.0
    %1650 = vmatpush1.msra.mxu0 0.0
    %1651 = vmatprep.subr.mxu0 0.0
    %1652 = vmatpush1.msra.mxu0 0.0
    %1653 = vmatprep.subr.mxu0 0.0
    %1654 = vmatpush1.msra.mxu0 0.0
    %1655 = vmatprep.subr.mxu0 0.0
    %1656 = vmatpush1.msra.mxu0 0.0
    %1657 = vmatprep.mubr.f32.mxu0 0.0
    %1658 = vmatmul.mubr.f32.gmra.mrb[0].mxu0 %v1591
    %v1659 = vpop.f32.mrb[0].mxu0
    %v1660 = vadd.f32 %v1560, %v1659
    %v1661 = vpop.f32.mrb[0].mxu0
    %1662 = vdwg.mxu0
    %v1663 = vadd.f32 %v1660, %v401
    %v1664 = vxor.u32 %v1663, 2147483648
    %v1665 = vmul.f32 %v1664, 1.442695
    %v1666 = vpow.pop %v1665
    %v1667 = vadd.f32 %v1666, 1.0
    %v1668 = vrcp.pop %v1667
    %v1669 = vmul.f32 1.0, %v1668
    %v1670 = vtanh.pop %v1663
    %v1671 = vmul.f32 %v1669, %v1471
    %1673 = vrot.lane.b32.xlu0 %v1670, 32
    %v1674 = vpop.permute.xlu0 %1673
    %v1676 = vmul.f32 %v1669, %v1674
    %1678 = vrot.lane.b32.xlu0 %v1676, 32
    %v1679 = vpop.permute.xlu0 %1678
    %v1681 = vadd.f32 %v1671, %v1679
    %v1682 = vtanh.pop %v1681
    %1684 = vrot.lane.b32.xlu0 %v1682, 32
    %v1685 = vpop.permute.xlu0 %1684
    %v1687 = vmul.f32 %v1669, %v1685
    %1689 = vrot.lane.b32.xlu0 %v1687, 64
    %v1690 = vpop.permute.xlu0 %1689
    %1692 = vst.msk [vmem:[#allocation3 + $0x30] sm:$0xff] %vm324, %v1690
    %1694 = vrot.lane.b32.xlu0 %v1687, 96
    %v1695 = vpop.permute.xlu0 %1694
    %v1697 = vsel %vm324, %v1590, %v1695
    %v1699 = vsel %vm220, %v1697, 0
    %1701 = vmatprep.subr.mxu0 %v200
    %1702 = vmatpush1.msra.mxu0 %v199
    %1703 = vmatprep.subr.mxu0 %v202
    %1704 = vmatpush1.msra.mxu0 %v201
    %1705 = vmatprep.subr.mxu0 %v204
    %1706 = vmatpush1.msra.mxu0 %v203
    %1707 = vmatprep.subr.mxu0 %v206
    %1708 = vmatpush1.msra.mxu0 %v205
    %1709 = vmatprep.subr.mxu0 %v208
    %1710 = vmatpush1.msra.mxu0 %v207
    %1711 = vmatprep.subr.mxu0 %v210
    %1712 = vmatpush1.msra.mxu0 %v209
    %1713 = vmatprep.subr.mxu0 %v212
    %1714 = vmatpush1.msra.mxu0 %v211
    %1715 = vmatprep.subr.mxu0 %v214
    %1716 = vmatpush1.msra.mxu0 %v213
    %1717 = vmatprep.subr.mxu0 0.0
    %1718 = vmatpush1.msra.mxu0 0.0
    %1719 = vmatprep.subr.mxu0 0.0
    %1720 = vmatpush1.msra.mxu0 0.0
    %1721 = vmatprep.subr.mxu0 0.0
    %1722 = vmatpush1.msra.mxu0 0.0
    %1723 = vmatprep.subr.mxu0 0.0
    %1724 = vmatpush1.msra.mxu0 0.0
    %1725 = vmatprep.subr.mxu0 0.0
    %1726 = vmatpush1.msra.mxu0 0.0
    %1727 = vmatprep.subr.mxu0 0.0
    %1728 = vmatpush1.msra.mxu0 0.0
    %1729 = vmatprep.subr.mxu0 0.0
    %1730 = vmatpush1.msra.mxu0 0.0
    %1731 = vmatprep.subr.mxu0 0.0
    %1732 = vmatpush1.msra.mxu0 0.0
    %1733 = vmatprep.subr.mxu0 0.0
    %1734 = vmatpush1.msra.mxu0 0.0
    %1735 = vmatprep.subr.mxu0 0.0
    %1736 = vmatpush1.msra.mxu0 0.0
    %1737 = vmatprep.subr.mxu0 0.0
    %1738 = vmatpush1.msra.mxu0 0.0
    %1739 = vmatprep.subr.mxu0 0.0
    %1740 = vmatpush1.msra.mxu0 0.0
    %1741 = vmatprep.subr.mxu0 0.0
    %1742 = vmatpush1.msra.mxu0 0.0
    %1743 = vmatprep.subr.mxu0 0.0
    %1744 = vmatpush1.msra.mxu0 0.0
    %1745 = vmatprep.subr.mxu0 0.0
    %1746 = vmatpush1.msra.mxu0 0.0
    %1747 = vmatprep.subr.mxu0 0.0
    %1748 = vmatpush1.msra.mxu0 0.0
    %1749 = vmatprep.subr.mxu0 0.0
    %1750 = vmatpush1.msra.mxu0 0.0
    %1751 = vmatprep.subr.mxu0 0.0
    %1752 = vmatpush1.msra.mxu0 0.0
    %1753 = vmatprep.subr.mxu0 0.0
    %1754 = vmatpush1.msra.mxu0 0.0
    %1755 = vmatprep.subr.mxu0 0.0
    %1756 = vmatpush1.msra.mxu0 0.0
    %1757 = vmatprep.subr.mxu0 0.0
    %1758 = vmatpush1.msra.mxu0 0.0
    %1759 = vmatprep.subr.mxu0 0.0
    %1760 = vmatpush1.msra.mxu0 0.0
    %1761 = vmatprep.subr.mxu0 0.0
    %1762 = vmatpush1.msra.mxu0 0.0
    %1763 = vmatprep.subr.mxu0 0.0
    %1764 = vmatpush1.msra.mxu0 0.0
    %1765 = vmatprep.mubr.f32.mxu0 0.0
    %1766 = vmatmul.mubr.f32.gmra.mrb[0].mxu0 %v1699
    %v1767 = vpop.f32.mrb[0].mxu0
    %v1768 = vadd.f32 0.0, %v1767
    %v1769 = vpop.f32.mrb[0].mxu0
    %v1770 = vadd.f32 0.0, %v1769
    %1771 = vdwg.mxu0
    %v1772 = vld [vmem:[#allocation2 + $0x38] sm:$0xff]
    %v1773 = vadd.f32 %v1772, %v1768
    %v1774 = vxor.u32 %v1773, 2147483648
    %v1775 = vmul.f32 %v1774, 1.442695
    %v1776 = vpow.pop %v1775
    %v1777 = vadd.f32 %v1776, 1.0
    %v1778 = vrcp.pop %v1777
    %v1779 = vmul.f32 1.0, %v1778
    %v1780 = vtanh.pop %v1773
    %v1781 = vmul.f32 %v1779, %v1581
    %1783 = vrot.lane.b32.xlu0 %v1780, 32
    %v1784 = vpop.permute.xlu0 %1783
    %v1786 = vmul.f32 %v1779, %v1784
    %1788 = vrot.lane.b32.xlu0 %v1786, 32
    %v1789 = vpop.permute.xlu0 %1788
    %v1791 = vadd.f32 %v1781, %v1789
    %v1792 = vtanh.pop %v1791
    %1794 = vrot.lane.b32.xlu0 %v1792, 32
    %v1795 = vpop.permute.xlu0 %1794
    %v1797 = vmul.f32 %v1779, %v1795
    %1799 = vrot.lane.b32.xlu0 %v1797, 64
    %v1800 = vpop.permute.xlu0 %1799
    %v1801 = vsel %vm324, %v1800, 0
    %1803 = vmatprep.subr.mxu0 0.0
    %1804 = vmatpush1.msra.mxu0 %v215
    %1805 = vmatprep.subr.mxu0 0.0
    %1806 = vmatpush1.msra.mxu0 %v216
    %1807 = vmatprep.subr.mxu0 0.0
    %1808 = vmatpush1.msra.mxu0 %v217
    %1809 = vmatprep.subr.mxu0 0.0
    %1810 = vmatpush1.msra.mxu0 %v218
    %1811 = vmatprep.subr.mxu0 0.0
    %1812 = vmatpush1.msra.mxu0 0.0
    %1813 = vmatprep.subr.mxu0 0.0
    %1814 = vmatpush1.msra.mxu0 0.0
    %1815 = vmatprep.subr.mxu0 0.0
    %1816 = vmatpush1.msra.mxu0 0.0
    %1817 = vmatprep.subr.mxu0 0.0
    %1818 = vmatpush1.msra.mxu0 0.0
    %1819 = vmatprep.subr.mxu0 0.0
    %1820 = vmatpush1.msra.mxu0 0.0
    %1821 = vmatprep.subr.mxu0 0.0
    %1822 = vmatpush1.msra.mxu0 0.0
    %1823 = vmatprep.subr.mxu0 0.0
    %1824 = vmatpush1.msra.mxu0 0.0
    %1825 = vmatprep.subr.mxu0 0.0
    %1826 = vmatpush1.msra.mxu0 0.0
    %1827 = vmatprep.subr.mxu0 0.0
    %1828 = vmatpush1.msra.mxu0 0.0
    %1829 = vmatprep.subr.mxu0 0.0
    %1830 = vmatpush1.msra.mxu0 0.0
    %1831 = vmatprep.subr.mxu0 0.0
    %1832 = vmatpush1.msra.mxu0 0.0
    %1833 = vmatprep.subr.mxu0 0.0
    %1834 = vmatpush1.msra.mxu0 0.0
    %1835 = vmatprep.subr.mxu0 0.0
    %1836 = vmatpush1.msra.mxu0 0.0
    %1837 = vmatprep.subr.mxu0 0.0
    %1838 = vmatpush1.msra.mxu0 0.0
    %1839 = vmatprep.subr.mxu0 0.0
    %1840 = vmatpush1.msra.mxu0 0.0
    %1841 = vmatprep.subr.mxu0 0.0
    %1842 = vmatpush1.msra.mxu0 0.0
    %1843 = vmatprep.subr.mxu0 0.0
    %1844 = vmatpush1.msra.mxu0 0.0
    %1845 = vmatprep.subr.mxu0 0.0
    %1846 = vmatpush1.msra.mxu0 0.0
    %1847 = vmatprep.subr.mxu0 0.0
    %1848 = vmatpush1.msra.mxu0 0.0
    %1849 = vmatprep.subr.mxu0 0.0
    %1850 = vmatpush1.msra.mxu0 0.0
    %1851 = vmatprep.subr.mxu0 0.0
    %1852 = vmatpush1.msra.mxu0 0.0
    %1853 = vmatprep.subr.mxu0 0.0
    %1854 = vmatpush1.msra.mxu0 0.0
    %1855 = vmatprep.subr.mxu0 0.0
    %1856 = vmatpush1.msra.mxu0 0.0
    %1857 = vmatprep.subr.mxu0 0.0
    %1858 = vmatpush1.msra.mxu0 0.0
    %1859 = vmatprep.subr.mxu0 0.0
    %1860 = vmatpush1.msra.mxu0 0.0
    %1861 = vmatprep.subr.mxu0 0.0
    %1862 = vmatpush1.msra.mxu0 0.0
    %1863 = vmatprep.subr.mxu0 0.0
    %1864 = vmatpush1.msra.mxu0 0.0
    %1865 = vmatprep.subr.mxu0 0.0
    %1866 = vmatpush1.msra.mxu0 0.0
    %1867 = vmatprep.mubr.f32.mxu0 0.0
    %1868 = vmatmul.mubr.f32.gmra.mrb[0].mxu0 %v1801
    %v1869 = vpop.f32.mrb[0].mxu0
    %v1870 = vadd.f32 %v1770, %v1869
    %v1871 = vpop.f32.mrb[0].mxu0
    %1872 = vdwg.mxu0
    %v1873 = vadd.f32 %v1870, %v401
    %v1874 = vxor.u32 %v1873, 2147483648
    %v1875 = vmul.f32 %v1874, 1.442695
    %v1876 = vpow.pop %v1875
    %v1877 = vadd.f32 %v1876, 1.0
    %v1878 = vrcp.pop %v1877
    %v1879 = vmul.f32 1.0, %v1878
    %v1880 = vtanh.pop %v1873
    %v1881 = vmul.f32 %v1879, %v1681
    %1883 = vrot.lane.b32.xlu0 %v1880, 32
    %v1884 = vpop.permute.xlu0 %1883
    %v1886 = vmul.f32 %v1879, %v1884
    %1888 = vrot.lane.b32.xlu0 %v1886, 32
    %v1889 = vpop.permute.xlu0 %1888
    %v1891 = vadd.f32 %v1881, %v1889
    %v1892 = vtanh.pop %v1891
    %1894 = vrot.lane.b32.xlu0 %v1892, 32
    %v1895 = vpop.permute.xlu0 %1894
    %v1897 = vmul.f32 %v1879, %v1895
    %1899 = vrot.lane.b32.xlu0 %v1897, 64
    %v1900 = vpop.permute.xlu0 %1899
    %1902 = vst.msk [vmem:[#allocation3 + $0x38] sm:$0xff] %vm324, %v1900
    %v1903 = vld [vmem:[#allocation3] sm:$0xff]
    %v1904 = vld [vmem:[#allocation3 + $0x8] sm:$0xff]
    %v1905 = vld [vmem:[#allocation3 + $0x10] sm:$0xff]
    %v1906 = vld [vmem:[#allocation3 + $0x18] sm:$0xff]
    %v1907 = vld [vmem:[#allocation3 + $0x20] sm:$0xff]
    %v1908 = vld [vmem:[#allocation3 + $0x28] sm:$0xff]
    %v1909 = vld [vmem:[#allocation3 + $0x30] sm:$0xff]
    %v1910 = vld [vmem:[#allocation3 + $0x38] sm:$0xff]
    %v1911 = vld [vmem:[%s6] sm:$0xff]
    %v1912 = vld [vmem:[%s6 + $0x8] sm:$0xff]
    %v1913 = vld [vmem:[%s6 + $0x10] sm:$0xff]
    %v1914 = vld [vmem:[%s6 + $0x18] sm:$0xff]
    %v1915 = vld [vmem:[%s7] sm:$0x1]
    %v1917 = vlaneseq
    %v1918 = vshrl.u32 %v1917, 7
    %v1919 = vsub.s32 0, %v1918
    %v1920 = vrot.slane %v1915, %v1919
    %v1923 = vsel %vm324, %v1903, 0
    %v1926 = vsel %vm324, %v1904, 0
    %v1929 = vsel %vm324, %v1905, 0
    %v1932 = vsel %vm324, %v1906, 0
    %v1935 = vsel %vm324, %v1907, 0
    %v1938 = vsel %vm324, %v1908, 0
    %v1941 = vsel %vm324, %v1909, 0
    %v1944 = vsel %vm324, %v1910, 0
    %1946 = vmatprep.subr.mxu0 0.0
    %1947 = vmatpush1.msra.mxu0 %v1911
    %1948 = vmatprep.subr.mxu0 0.0
    %1949 = vmatpush1.msra.mxu0 %v1912
    %1950 = vmatprep.subr.mxu0 0.0
    %1951 = vmatpush1.msra.mxu0 %v1913
    %1952 = vmatprep.subr.mxu0 0.0
    %1953 = vmatpush1.msra.mxu0 %v1914
    %1954 = vmatprep.subr.mxu0 0.0
    %1955 = vmatpush1.msra.mxu0 0.0
    %1956 = vmatprep.subr.mxu0 0.0
    %1957 = vmatpush1.msra.mxu0 0.0
    %1958 = vmatprep.subr.mxu0 0.0
    %1959 = vmatpush1.msra.mxu0 0.0
    %1960 = vmatprep.subr.mxu0 0.0
    %1961 = vmatpush1.msra.mxu0 0.0
    %1962 = vmatprep.subr.mxu0 0.0
    %1963 = vmatpush1.msra.mxu0 0.0
    %1964 = vmatprep.subr.mxu0 0.0
    %1965 = vmatpush1.msra.mxu0 0.0
    %1966 = vmatprep.subr.mxu0 0.0
    %1967 = vmatpush1.msra.mxu0 0.0
    %1968 = vmatprep.subr.mxu0 0.0
    %1969 = vmatpush1.msra.mxu0 0.0
    %1970 = vmatprep.subr.mxu0 0.0
    %1971 = vmatpush1.msra.mxu0 0.0
    %1972 = vmatprep.subr.mxu0 0.0
    %1973 = vmatpush1.msra.mxu0 0.0
    %1974 = vmatprep.subr.mxu0 0.0
    %1975 = vmatpush1.msra.mxu0 0.0
    %1976 = vmatprep.subr.mxu0 0.0
    %1977 = vmatpush1.msra.mxu0 0.0
    %1978 = vmatprep.subr.mxu0 0.0
    %1979 = vmatpush1.msra.mxu0 0.0
    %1980 = vmatprep.subr.mxu0 0.0
    %1981 = vmatpush1.msra.mxu0 0.0
    %1982 = vmatprep.subr.mxu0 0.0
    %1983 = vmatpush1.msra.mxu0 0.0
    %1984 = vmatprep.subr.mxu0 0.0
    %1985 = vmatpush1.msra.mxu0 0.0
    %1986 = vmatprep.subr.mxu0 0.0
    %1987 = vmatpush1.msra.mxu0 0.0
    %1988 = vmatprep.subr.mxu0 0.0
    %1989 = vmatpush1.msra.mxu0 0.0
    %1990 = vmatprep.subr.mxu0 0.0
    %1991 = vmatpush1.msra.mxu0 0.0
    %1992 = vmatprep.subr.mxu0 0.0
    %1993 = vmatpush1.msra.mxu0 0.0
    %1994 = vmatprep.subr.mxu0 0.0
    %1995 = vmatpush1.msra.mxu0 0.0
    %1996 = vmatprep.subr.mxu0 0.0
    %1997 = vmatpush1.msra.mxu0 0.0
    %1998 = vmatprep.subr.mxu0 0.0
    %1999 = vmatpush1.msra.mxu0 0.0
    %2000 = vmatprep.subr.mxu0 0.0
    %2001 = vmatpush1.msra.mxu0 0.0
    %2002 = vmatprep.subr.mxu0 0.0
    %2003 = vmatpush1.msra.mxu0 0.0
    %2004 = vmatprep.subr.mxu0 0.0
    %2005 = vmatpush1.msra.mxu0 0.0
    %2006 = vmatprep.subr.mxu0 0.0
    %2007 = vmatpush1.msra.mxu0 0.0
    %2008 = vmatprep.subr.mxu0 0.0
    %2009 = vmatpush1.msra.mxu0 0.0
    %2010 = vmatprep.mubr.f32.mxu0 0.0
    %2011 = vmatmul.mubr.f32.gmra.mrb[0].mxu0 %v1923
    %v2012 = vpop.f32.mrb[0].mxu0
    %v2013 = vadd.f32 %v1920, %v2012
    %v2014 = vpop.f32.mrb[0].mxu0
    %2015 = vmatprep.mubr.f32.mxu0 0.0
    %2016 = vmatmul.mubr.f32.gmra.mrb[0].mxu0 %v1926
    %v2017 = vpop.f32.mrb[0].mxu0
    %v2018 = vadd.f32 %v1920, %v2017
    %v2019 = vpop.f32.mrb[0].mxu0
    %2020 = vmatprep.mubr.f32.mxu0 0.0
    %2021 = vmatmul.mubr.f32.gmra.mrb[0].mxu0 %v1929
    %v2022 = vpop.f32.mrb[0].mxu0
    %v2023 = vadd.f32 %v1920, %v2022
    %v2024 = vpop.f32.mrb[0].mxu0
    %2025 = vmatprep.mubr.f32.mxu0 0.0
    %2026 = vmatmul.mubr.f32.gmra.mrb[0].mxu0 %v1932
    %v2027 = vpop.f32.mrb[0].mxu0
    %v2028 = vadd.f32 %v1920, %v2027
    %v2029 = vpop.f32.mrb[0].mxu0
    %2030 = vmatprep.mubr.f32.mxu0 0.0
    %2031 = vmatmul.mubr.f32.gmra.mrb[0].mxu0 %v1935
    %v2032 = vpop.f32.mrb[0].mxu0
    %v2033 = vadd.f32 %v1920, %v2032
    %v2034 = vpop.f32.mrb[0].mxu0
    %2035 = vmatprep.mubr.f32.mxu0 0.0
    %2036 = vmatmul.mubr.f32.gmra.mrb[0].mxu0 %v1938
    %v2037 = vpop.f32.mrb[0].mxu0
    %v2038 = vadd.f32 %v1920, %v2037
    %v2039 = vpop.f32.mrb[0].mxu0
    %2040 = vmatprep.mubr.f32.mxu0 0.0
    %2041 = vmatmul.mubr.f32.gmra.mrb[0].mxu0 %v1941
    %v2042 = vpop.f32.mrb[0].mxu0
    %v2043 = vadd.f32 %v1920, %v2042
    %v2044 = vpop.f32.mrb[0].mxu0
    %2045 = vmatprep.mubr.f32.mxu0 0.0
    %2046 = vmatmul.mubr.f32.gmra.mrb[0].mxu0 %v1944
    %v2047 = vpop.f32.mrb[0].mxu0
    %v2048 = vadd.f32 %v1920, %v2047
    %v2049 = vpop.f32.mrb[0].mxu0
    %2050 = vdwg.mxu0
    %2051 = vst [vmem:[#allocation7] sm:$0xff] %v2013
    %2052 = vst [vmem:[#allocation7 + $0x8] sm:$0xff] %v2018
    %2053 = vst [vmem:[#allocation7 + $0x10] sm:$0xff] %v2023
    %2054 = vst [vmem:[#allocation7 + $0x18] sm:$0xff] %v2028
    %2055 = vst [vmem:[#allocation7 + $0x20] sm:$0xff] %v2033
    %2056 = vst [vmem:[#allocation7 + $0x28] sm:$0xff] %v2038
    %2057 = vst [vmem:[#allocation7 + $0x30] sm:$0xff] %v2043
    %2058 = vst [vmem:[#allocation7 + $0x38] sm:$0xff] %v2048
    // Predicated region
    $region38: #{tpu_custom_call.1} parent=1 // pred_check
      _
    $region39: #{tpu_custom_call.1} parent=1 // pred_check_branch
      %2060 = sbr.rel (0) target = $region41
    $region40: #{tpu_custom_call.1} parent=1 // pred_region
      %s2062 = ssub.s32 1024, 1024
      %2063 = vsyncadd [#allocation6], %s2062
      %s2064 = sshll.u32 [#allocation7], 4
      %s2065 = int_to_ptr.vmem [resolvable:$true] %s2064
      %2070 = dma.vmem_to_hbm [thread:$0]  %s2065, 1024, %s8, [#allocation6], 128, 128, 8
    $region41: #{tpu_custom_call.1} parent=1 // pred_fallthru
      _
    // Predicated region
    $region42: #{tpu_custom_call.1} parent=1 // pred_check
      _
    $region43: #{tpu_custom_call.1} parent=1 // pred_check_branch
      %2072 = sbr.rel (0) target = $region45
    $region44: #{tpu_custom_call.1} parent=1 // pred_region
      %2073 = dma.done [#allocation6], 1024
    $region45: #{tpu_custom_call.1} parent=1 // pred_fallthru
      _
    %2074 = vsyncpa [#allocation5], 1
    %2075 = vsyncpa [#allocation6], 1

</llo_original>
